<compile_context>
chip_gen: v7x
topology: tpu7x:2x2x1
jax: 0.10.0
libtpu: 0.0.40
codegen_flags: <defaults>
</compile_context>

<pallas_src>
import jax
import jax.numpy as jnp
from jax.experimental import pallas as pl
from jax.experimental.pallas import tpu as pltpu

MAX_LEN = 16            # sequence length (module uses 128)
HIDDEN = 128            # BERT hidden size (module uses 768)
C1 = 128                # conv1 out channels (same as module)
C2 = 64                 # conv2 out channels (same as module)
C2_PAD = 128            # conv2 channels padded to a full lane width
L_POOL = MAX_LEN // 4   # seq len after two MaxPool1d(2)
N_CLASSES = 8
N_PAD = 128             # FC output padded to a full lane width
VOCAB = 512
B_TILE = 16             # examples per grid step -> M = B_TILE * MAX_LEN = 256 MXU rows


def bert_cnn_head_kernel(h_ref, w1_ref, b1_ref, w2_ref, b2_ref, wfc_ref, bfc_ref, out_ref):
    seq, bt, d = h_ref.shape          # seq-major block: (L, b_tile, D)
    rows1 = seq * bt
    c1 = w1_ref.shape[1] // 3
    c2p = w2_ref.shape[1] // 3
    l2, l4 = seq // 2, seq // 4
    bf16 = h_ref.dtype

    def conv_relu(x_bf16, w_cat_ref, b_row_ref, c_out, n_rows):
        # One MXU matmul with the 3 taps fused on the OUTPUT (N = 3*c_out); tap shifts are
        # whole-vreg rolls on the f32 result (roll along M commutes with the matmul).
        y_all = jnp.dot(x_bf16, w_cat_ref[...], preferred_element_type=jnp.float32)
        t0 = y_all[:, :c_out]                 # contribution of x[l-1]
        t1 = y_all[:, c_out:2 * c_out]        # contribution of x[l]
        t2 = y_all[:, 2 * c_out:]             # contribution of x[l+1]
        pos = jax.lax.broadcasted_iota(jnp.int32, (n_rows, 1), 0)
        # rows are seq-major (row r = l*bt + b): x[l-1] lives bt rows up, x[l+1] bt rows down.
        # Rolls wrap across the array but the wrapped rows are exactly the masked boundary
        # rows (Conv1d padding=1 zero padding).
        prev = jnp.where(pos < bt, 0.0, pltpu.roll(t0, bt, axis=0))
        nxt = jnp.where(pos >= n_rows - bt, 0.0, pltpu.roll(t2, n_rows - bt, axis=0))
        return jnp.maximum(t1 + prev + nxt + b_row_ref[...], 0.0)   # ReLU, f32 on the VPU

    # ---- conv1 + ReLU ----  (L, bt, D) -> (L*bt, D) is layout-preserving (bt % 8 == 0)
    x = h_ref[...].reshape(rows1, d)                         # bf16, seq-major rows
    y1 = conv_relu(x, w1_ref, b1_ref, c1, rows1)             # (L*bt, C1) f32

    # ---- MaxPool1d(2): adjacent seq positions = adjacent bt-row blocks (pure VPU max) ----
    p1 = jnp.max(y1.reshape(l2, 2, bt, c1), axis=1).reshape(l2 * bt, c1)

    # ---- conv2 + ReLU (channels zero-padded to c2p so stores stay lane-dense) ----
    y2 = conv_relu(p1.astype(bf16), w2_ref, b2_ref, c2p, l2 * bt)

    # ---- second MaxPool1d(2): result kept as (l4, bt, c2p) — no flatten relayout ----
    p2 = jnp.max(y2.reshape(l4, 2, bt, c2p), axis=1)         # (l4, bt, c2p) f32

    # ---- fc over the existing (l, b, c) layout; nn.Dropout(0.3) is identity at inference ----
    # batched matmul over l (MXU), then a cheap leading-axis sum (VPU); the PyTorch
    # channel-major flatten is folded into the wfc weight permutation wrapper-side.
    z = jnp.einsum('lbc,lcn->lbn', p2.astype(bf16), wfc_ref[...],
                   preferred_element_type=jnp.float32)       # (l4, bt, N_PAD) f32
    out_ref[...] = jnp.sum(z, axis=0) + bfc_ref[...]


def bert_cnn_classifier_forward(input_ids, attention_mask, params, *, b_tile=B_TILE):
    # TODO(synk): the pretrained BertModel encoder has no in-script Pallas equivalent; a
    # deterministic bf16 embedding lookup masked by attention_mask stands in for
    # `outputs.last_hidden_state`.  The gather produces the seq-major (L, B, D) bf16 layout
    # directly, so the hidden states hit HBM exactly once (gather+mask+cast fuse under jit).
    embed = params['embed'].astype(jnp.bfloat16)
    h_t = embed[input_ids.T] * attention_mask.T[:, :, None].astype(jnp.bfloat16)   # (L, B, D)
    L, B, D = h_t.shape
    assert B % b_tile == 0, "batch must be a multiple of the batch tile"
    assert b_tile % 8 == 0 and L % 4 == 0

    # PyTorch Conv1d weight (Co, Ci, K=3) -> output-tap-fused weight (Ci, 3*Co), bf16.
    w1_cat = jnp.transpose(params['conv1_w'], (1, 2, 0)).reshape(D, 3 * C1).astype(jnp.bfloat16)
    # conv2: pad output channels 64 -> 128 with exact zeros (bias and fc rows also zero, so
    # ReLU(0)=0 and the padded channels never touch the logits).
    w2_t = jnp.transpose(params['conv2_w'], (1, 2, 0))                       # (C1, 3, C2)
    w2_cat = jnp.pad(w2_t, ((0, 0), (0, 0), (0, C2_PAD - C2))).reshape(
        C1, 3 * C2_PAD).astype(jnp.bfloat16)
    b1 = params['conv1_b'].reshape(1, C1).astype(jnp.float32)
    b2 = jnp.pad(params['conv2_b'], (0, C2_PAD - C2)).reshape(1, C2_PAD).astype(jnp.float32)
    # PyTorch flattens (B, C2, L/4) channel-major (index = c*L_POOL + l); the kernel contracts
    # over (l, c) directly -> reshape fc weight to (L_POOL, C2, n) and zero-pad to
    # (L_POOL, C2_PAD, N_PAD) so the kernel's output stores are lane-dense.
    wfc3 = jnp.transpose(params['fc_w'].reshape(N_CLASSES, C2, L_POOL), (2, 1, 0))
    wfc3 = jnp.pad(wfc3, ((0, 0), (0, C2_PAD - C2), (0, N_PAD - N_CLASSES))).astype(jnp.bfloat16)
    bfc = jnp.pad(params['fc_b'], (0, N_PAD - N_CLASSES)).reshape(1, N_PAD).astype(jnp.float32)

    def _resident_spec(arr):
        # constant block index -> Pallas keeps the whole array VMEM-resident across grid steps
        zeros = (0,) * arr.ndim
        return pl.BlockSpec(arr.shape, lambda i: zeros)

    logits_pad = pl.pallas_call(
        bert_cnn_head_kernel,
        out_shape=jax.ShapeDtypeStruct((B, N_PAD), jnp.float32),
        grid=(B // b_tile,),
        in_specs=[
            # hidden states stream per grid step (batch slice of the seq-major layout);
            # at full scale, add pipeline_mode=pl.Buffered(3) here if xprof shows exposed DMA.
            pl.BlockSpec((L, b_tile, D), lambda i: (0, i, 0)),
            _resident_spec(w1_cat),
            _resident_spec(b1),
            _resident_spec(w2_cat),
            _resident_spec(b2),
            _resident_spec(wfc3),
            _resident_spec(bfc),
        ],
        out_specs=pl.BlockSpec((b_tile, N_PAD), lambda i: (i, 0)),
        compiler_params=pltpu.CompilerParams(
            dimension_semantics=("parallel",),        # shard batch tiles across TensorCores
            # Small here; raise to 64-96 MiB on v5e/v6e at full scale, keep the per-step
            # footprint under ~24-28 MiB on v7x (64 MiB physical VMEM).
            vmem_limit_bytes=32 * 1024 * 1024,
        ),
    )(h_t, w1_cat, b1, w2_cat, b2, wfc3, bfc)
    return logits_pad[:, :N_CLASSES]


def reference_forward(input_ids, attention_mask, params):
    """Plain-JAX reference mirroring the PyTorch NCL semantics exactly.  Matmul inputs are
    quantized to bf16 (then computed in full f32) to mirror the kernel's bf16 MXU operands
    with f32 accumulation, so a tight tolerance still holds."""
    q = lambda a: a.astype(jnp.bfloat16).astype(jnp.float32)
    hi = jax.lax.Precision.HIGHEST
    h = params['embed'].astype(jnp.bfloat16)[input_ids].astype(jnp.float32) \
        * attention_mask[..., None].astype(jnp.float32)
    x = jnp.transpose(h, (0, 2, 1))                              # (B, C, L) like permute(0,2,1)

    def conv1d(x, w, b):                                         # w: (Co, Ci, 3), padding=1
        B_, Ci, L_ = x.shape
        xp = jnp.pad(q(x), ((0, 0), (0, 0), (1, 1)))
        out = jnp.broadcast_to(b[None, :, None], (B_, w.shape[0], L_)).astype(jnp.float32)
        for t in range(3):
            out = out + jnp.einsum('bcl,oc->bol', xp[:, :, t:t + L_], q(w[:, :, t]), precision=hi)
        return out

    x = jax.nn.relu(conv1d(x, params['conv1_w'], params['conv1_b']))
    x = jnp.max(x.reshape(x.shape[0], x.shape[1], x.shape[2] // 2, 2), axis=-1)
    x = jax.nn.relu(conv1d(x, params['conv2_w'], params['conv2_b']))
    x = jnp.max(x.reshape(x.shape[0], x.shape[1], x.shape[2] // 2, 2), axis=-1)
    x = x.reshape(x.shape[0], -1)                                # channel-major flatten (.view)
    return jnp.einsum('bf,nf->bn', q(x), q(params['fc_w']), precision=hi) + params['fc_b']


if __name__ == "__main__":
    key = jax.random.PRNGKey(0)
    ks = jax.random.split(key, 8)
    B = 32   # two grid steps of B_TILE=16 (keeps >= 2 parallel steps for v7x's two TCs)

    params = {
        'embed':   jax.random.normal(ks[0], (VOCAB, HIDDEN), jnp.float32) * 0.02,
        'conv1_w': jax.random.normal(ks[1], (C1, HIDDEN, 3), jnp.float32) * 0.05,
        'conv1_b': jax.random.normal(ks[2], (C1,), jnp.float32) * 0.05,
        'conv2_w': jax.random.normal(ks[3], (C2, C1, 3), jnp.float32) * 0.05,
        'conv2_b': jax.random.normal(ks[4], (C2,), jnp.float32) * 0.05,
        'fc_w':    jax.random.normal(ks[5], (N_CLASSES, C2 * L_POOL), jnp.float32) * 0.05,
        'fc_b':    jax.random.normal(ks[6], (N_CLASSES,), jnp.float32) * 0.05,
    }
    input_ids = jax.random.randint(ks[7], (B, MAX_LEN), 0, VOCAB)
    attention_mask = jnp.ones((B, MAX_LEN), jnp.int32)

    fwd = jax.jit(bert_cnn_classifier_forward)
    out = jax.block_until_ready(fwd(input_ids, attention_mask, params))

    ref = reference_forward(input_ids, attention_mask, params)
    assert out.shape == (B, N_CLASSES)
    assert jnp.allclose(out, ref, atol=5e-3, rtol=5e-3), (
        f"Pallas kernel mismatch vs reference: max|diff|={jnp.max(jnp.abs(out - ref))}")
    print("KERNEL_OK")
</pallas_src>

<mosaic_0001>
module attributes {stable_mosaic.version = 11 : i64} {
  func.func @bert_cnn_head_kernel(%arg0: i32, %arg1: memref<16x16x128xbf16, #tpu.memory_space<vmem>>, %arg2: memref<128x384xbf16, #tpu.memory_space<vmem>>, %arg3: memref<1x128xf32, #tpu.memory_space<vmem>>, %arg4: memref<128x384xbf16, #tpu.memory_space<vmem>>, %arg5: memref<1x128xf32, #tpu.memory_space<vmem>>, %arg6: memref<4x128x128xbf16, #tpu.memory_space<vmem>>, %arg7: memref<1x128xf32, #tpu.memory_space<vmem>>, %arg8: memref<16x128xf32, #tpu.memory_space<vmem>>) attributes {dimension_semantics = [#tpu.dimension_semantics<parallel>], iteration_bounds = array<i64: 2>, scalar_prefetch = 0 : i64, scratch_operands = 0 : i64, tpu.core_type = #tpu.core_type<tc>, window_params = [{transform_indices = @transform_0, window_bounds = array<i64: 16, 16, 128>}, {pipeline_mode = #tpu.pipeline_mode<synchronous>, transform_indices = @transform_1, window_bounds = array<i64: 128, 384>}, {pipeline_mode = #tpu.pipeline_mode<synchronous>, transform_indices = @transform_2, window_bounds = array<i64: 1, 128>}, {pipeline_mode = #tpu.pipeline_mode<synchronous>, transform_indices = @transform_3, window_bounds = array<i64: 128, 384>}, {pipeline_mode = #tpu.pipeline_mode<synchronous>, transform_indices = @transform_4, window_bounds = array<i64: 1, 128>}, {pipeline_mode = #tpu.pipeline_mode<synchronous>, transform_indices = @transform_5, window_bounds = array<i64: 4, 128, 128>}, {pipeline_mode = #tpu.pipeline_mode<synchronous>, transform_indices = @transform_6, window_bounds = array<i64: 1, 128>}, {transform_indices = @transform_7, window_bounds = array<i64: 16, 128>}]} {
    %c0 = arith.constant 0 : index
    %c0_0 = arith.constant 0 : index
    %c0_1 = arith.constant 0 : index
    %0 = vector.load %arg1[%c0, %c0_0, %c0_1] : memref<16x16x128xbf16, #tpu.memory_space<vmem>>, vector<16x16x128xbf16>
    %1 = vector.shape_cast %0 : vector<16x16x128xbf16> to vector<256x128xbf16>
    %c0_2 = arith.constant 0 : index
    %c0_3 = arith.constant 0 : index
    %2 = vector.load %arg2[%c0_2, %c0_3] : memref<128x384xbf16, #tpu.memory_space<vmem>>, vector<128x384xbf16>
    %cst = arith.constant dense<0.000000e+00> : vector<256x384xf32>
    %3 = tpu.matmul %1, %2, %cst {dimension_numbers = #tpu.dot_dimension_numbers<[1], [0], [0], [1], [0, 0, 1, 1], [], []>} : vector<256x128xbf16>, vector<128x384xbf16>, vector<256x384xf32> -> vector<256x384xf32>
    %4 = vector.extract_strided_slice %3 {offsets = [0, 0], sizes = [256, 128], strides = [1, 1]} : vector<256x384xf32> to vector<256x128xf32>
    %5 = vector.extract_strided_slice %3 {offsets = [0, 128], sizes = [256, 128], strides = [1, 1]} : vector<256x384xf32> to vector<256x128xf32>
    %6 = vector.extract_strided_slice %3 {offsets = [0, 256], sizes = [256, 128], strides = [1, 1]} : vector<256x384xf32> to vector<256x128xf32>
    %7 = tpu.iota {dimensions = array<i32: 0>} : vector<256x1xi32>
    %c16_i32 = arith.constant 16 : i32
    %8 = vector.broadcast %c16_i32 : i32 to vector<256x1xi32>
    %9 = arith.cmpi slt, %7, %8 : vector<256x1xi32>
    %c16_i32_4 = arith.constant 16 : i32
    %10 = tpu.dynamic_rotate %4 by %c16_i32_4 dim 0 : vector<256x128xf32>, i32 -> vector<256x128xf32>
    %cst_5 = arith.constant 0.000000e+00 : f32
    %11 = vector.shape_cast %9 : vector<256x1xi1> to vector<256x1xi1>
    %12 = vector.broadcast %11 : vector<256x1xi1> to vector<256x128xi1>
    %13 = vector.broadcast %cst_5 : f32 to vector<256x128xf32>
    %14 = arith.select %12, %13, %10 : vector<256x128xi1>, vector<256x128xf32>
    %c240_i32 = arith.constant 240 : i32
    %15 = vector.broadcast %c240_i32 : i32 to vector<256x1xi32>
    %16 = arith.cmpi sge, %7, %15 : vector<256x1xi32>
    %c240_i32_6 = arith.constant 240 : i32
    %17 = tpu.dynamic_rotate %6 by %c240_i32_6 dim 0 : vector<256x128xf32>, i32 -> vector<256x128xf32>
    %cst_7 = arith.constant 0.000000e+00 : f32
    %18 = vector.shape_cast %16 : vector<256x1xi1> to vector<256x1xi1>
    %19 = vector.broadcast %18 : vector<256x1xi1> to vector<256x128xi1>
    %20 = vector.broadcast %cst_7 : f32 to vector<256x128xf32>
    %21 = arith.select %19, %20, %17 : vector<256x128xi1>, vector<256x128xf32>
    %22 = arith.addf %5, %14 : vector<256x128xf32>
    %23 = arith.addf %22, %21 : vector<256x128xf32>
    %c0_8 = arith.constant 0 : index
    %c0_9 = arith.constant 0 : index
    %24 = vector.load %arg3[%c0_8, %c0_9] : memref<1x128xf32, #tpu.memory_space<vmem>>, vector<1x128xf32>
    %25 = vector.broadcast %24 : vector<1x128xf32> to vector<256x128xf32>
    %26 = arith.addf %23, %25 : vector<256x128xf32>
    %cst_10 = arith.constant 0.000000e+00 : f32
    %27 = vector.broadcast %cst_10 : f32 to vector<256x128xf32>
    %28 = arith.maximumf %26, %27 : vector<256x128xf32>
    %29 = vector.shape_cast %28 : vector<256x128xf32> to vector<8x2x16x128xf32>
    %cst_11 = arith.constant dense<0xFF800000> : vector<8x16x128xf32>
    %30 = vector.multi_reduction <maximumf>, %29, %cst_11 [1] : vector<8x2x16x128xf32> to vector<8x16x128xf32>
    %31 = vector.shape_cast %30 : vector<8x16x128xf32> to vector<128x128xf32>
    %32 = arith.truncf %31 : vector<128x128xf32> to vector<128x128xbf16>
    %c0_12 = arith.constant 0 : index
    %c0_13 = arith.constant 0 : index
    %33 = vector.load %arg4[%c0_12, %c0_13] : memref<128x384xbf16, #tpu.memory_space<vmem>>, vector<128x384xbf16>
    %cst_14 = arith.constant dense<0.000000e+00> : vector<128x384xf32>
    %34 = tpu.matmul %32, %33, %cst_14 {dimension_numbers = #tpu.dot_dimension_numbers<[1], [0], [0], [1], [0, 0, 1, 1], [], []>} : vector<128x128xbf16>, vector<128x384xbf16>, vector<128x384xf32> -> vector<128x384xf32>
    %35 = vector.extract_strided_slice %34 {offsets = [0, 0], sizes = [128, 128], strides = [1, 1]} : vector<128x384xf32> to vector<128x128xf32>
    %36 = vector.extract_strided_slice %34 {offsets = [0, 128], sizes = [128, 128], strides = [1, 1]} : vector<128x384xf32> to vector<128x128xf32>
    %37 = vector.extract_strided_slice %34 {offsets = [0, 256], sizes = [128, 128], strides = [1, 1]} : vector<128x384xf32> to vector<128x128xf32>
    %38 = tpu.iota {dimensions = array<i32: 0>} : vector<128x1xi32>
    %c16_i32_15 = arith.constant 16 : i32
    %39 = vector.broadcast %c16_i32_15 : i32 to vector<128x1xi32>
    %40 = arith.cmpi slt, %38, %39 : vector<128x1xi32>
    %c16_i32_16 = arith.constant 16 : i32
    %41 = tpu.dynamic_rotate %35 by %c16_i32_16 dim 0 : vector<128x128xf32>, i32 -> vector<128x128xf32>
    %cst_17 = arith.constant 0.000000e+00 : f32
    %42 = vector.shape_cast %40 : vector<128x1xi1> to vector<128x1xi1>
    %43 = vector.broadcast %42 : vector<128x1xi1> to vector<128x128xi1>
    %44 = vector.broadcast %cst_17 : f32 to vector<128x128xf32>
    %45 = arith.select %43, %44, %41 : vector<128x128xi1>, vector<128x128xf32>
    %c112_i32 = arith.constant 112 : i32
    %46 = vector.broadcast %c112_i32 : i32 to vector<128x1xi32>
    %47 = arith.cmpi sge, %38, %46 : vector<128x1xi32>
    %c112_i32_18 = arith.constant 112 : i32
    %48 = tpu.dynamic_rotate %37 by %c112_i32_18 dim 0 : vector<128x128xf32>, i32 -> vector<128x128xf32>
    %cst_19 = arith.constant 0.000000e+00 : f32
    %49 = vector.shape_cast %47 : vector<128x1xi1> to vector<128x1xi1>
    %50 = vector.broadcast %49 : vector<128x1xi1> to vector<128x128xi1>
    %51 = vector.broadcast %cst_19 : f32 to vector<128x128xf32>
    %52 = arith.select %50, %51, %48 : vector<128x128xi1>, vector<128x128xf32>
    %53 = arith.addf %36, %45 : vector<128x128xf32>
    %54 = arith.addf %53, %52 : vector<128x128xf32>
    %c0_20 = arith.constant 0 : index
    %c0_21 = arith.constant 0 : index
    %55 = vector.load %arg5[%c0_20, %c0_21] : memref<1x128xf32, #tpu.memory_space<vmem>>, vector<1x128xf32>
    %56 = vector.broadcast %55 : vector<1x128xf32> to vector<128x128xf32>
    %57 = arith.addf %54, %56 : vector<128x128xf32>
    %cst_22 = arith.constant 0.000000e+00 : f32
    %58 = vector.broadcast %cst_22 : f32 to vector<128x128xf32>
    %59 = arith.maximumf %57, %58 : vector<128x128xf32>
    %60 = vector.shape_cast %59 : vector<128x128xf32> to vector<4x2x16x128xf32>
    %cst_23 = arith.constant dense<0xFF800000> : vector<4x16x128xf32>
    %61 = vector.multi_reduction <maximumf>, %60, %cst_23 [1] : vector<4x2x16x128xf32> to vector<4x16x128xf32>
    %62 = arith.truncf %61 : vector<4x16x128xf32> to vector<4x16x128xbf16>
    %c0_24 = arith.constant 0 : index
    %c0_25 = arith.constant 0 : index
    %c0_26 = arith.constant 0 : index
    %63 = vector.load %arg6[%c0_24, %c0_25, %c0_26] : memref<4x128x128xbf16, #tpu.memory_space<vmem>>, vector<4x128x128xbf16>
    "tpu.trace_start"() <{level = 10 : i32, message = "lbc,lcn->lbn"}> : () -> ()
    %cst_27 = arith.constant dense<0.000000e+00> : vector<4x16x128xf32>
    %64 = tpu.matmul %62, %63, %cst_27 {dimension_numbers = #tpu.dot_dimension_numbers<[2], [1], [1], [2], [0, 0, 0, 1, 1, 2], [0], [0]>} : vector<4x16x128xbf16>, vector<4x128x128xbf16>, vector<4x16x128xf32> -> vector<4x16x128xf32>
    "tpu.trace_stop"() : () -> ()
    %cst_28 = arith.constant dense<0.000000e+00> : vector<16x128xf32>
    %65 = vector.multi_reduction <add>, %64, %cst_28 [0] : vector<4x16x128xf32> to vector<16x128xf32>
    %c0_29 = arith.constant 0 : index
    %c0_30 = arith.constant 0 : index
    %66 = vector.load %arg7[%c0_29, %c0_30] : memref<1x128xf32, #tpu.memory_space<vmem>>, vector<1x128xf32>
    %67 = vector.broadcast %66 : vector<1x128xf32> to vector<16x128xf32>
    %68 = arith.addf %65, %67 : vector<16x128xf32>
    %c0_31 = arith.constant 0 : index
    %c0_32 = arith.constant 0 : index
    %69 = vector.load %arg8[%c0_31, %c0_32] : memref<16x128xf32, #tpu.memory_space<vmem>>, vector<16x128xf32>
    tpu.vector_store %arg8[%c0_31, %c0_32], %68 {strides = array<i32>} : memref<16x128xf32, #tpu.memory_space<vmem>>, vector<16x128xf32>,
    return
  }
  func.func @transform_0(%arg0: i32) -> (i32, i32, i32) {
    %c0_i32 = arith.constant 0 : i32
    %c0_i32_0 = arith.constant 0 : i32
    %c0_i32_1 = arith.constant 0 : i32
    return %c0_i32, %arg0, %c0_i32_0 : i32, i32, i32
  }
  func.func @transform_1(%arg0: i32) -> (i32, i32) {
    %c0_i32 = arith.constant 0 : i32
    %c0_i32_0 = arith.constant 0 : i32
    %c0_i32_1 = arith.constant 0 : i32
    return %c0_i32, %c0_i32_0 : i32, i32
  }
  func.func @transform_2(%arg0: i32) -> (i32, i32) {
    %c0_i32 = arith.constant 0 : i32
    %c0_i32_0 = arith.constant 0 : i32
    %c0_i32_1 = arith.constant 0 : i32
    return %c0_i32, %c0_i32_0 : i32, i32
  }
  func.func @transform_3(%arg0: i32) -> (i32, i32) {
    %c0_i32 = arith.constant 0 : i32
    %c0_i32_0 = arith.constant 0 : i32
    %c0_i32_1 = arith.constant 0 : i32
    return %c0_i32, %c0_i32_0 : i32, i32
  }
  func.func @transform_4(%arg0: i32) -> (i32, i32) {
    %c0_i32 = arith.constant 0 : i32
    %c0_i32_0 = arith.constant 0 : i32
    %c0_i32_1 = arith.constant 0 : i32
    return %c0_i32, %c0_i32_0 : i32, i32
  }
  func.func @transform_5(%arg0: i32) -> (i32, i32, i32) {
    %c0_i32 = arith.constant 0 : i32
    %c0_i32_0 = arith.constant 0 : i32
    %c0_i32_1 = arith.constant 0 : i32
    %c0_i32_2 = arith.constant 0 : i32
    return %c0_i32, %c0_i32_0, %c0_i32_1 : i32, i32, i32
  }
  func.func @transform_6(%arg0: i32) -> (i32, i32) {
    %c0_i32 = arith.constant 0 : i32
    %c0_i32_0 = arith.constant 0 : i32
    %c0_i32_1 = arith.constant 0 : i32
    return %c0_i32, %c0_i32_0 : i32, i32
  }
  func.func @transform_7(%arg0: i32) -> (i32, i32) {
    %c0_i32 = arith.constant 0 : i32
    %c0_i32_0 = arith.constant 0 : i32
    return %arg0, %c0_i32 : i32, i32
  }
}

</mosaic_0001>

<llo_original>
// kernel: bert_cnn_classifier_forward.1
$region0: #{bert_cnn_classifier_forward.1}
  #allocation0 [shape = 'u32[]', space=smem, size = 0x4, offset = 0x4, fixed_abs, tag = 'smem constant byte address 0x4 - core index']
  #allocation1 [shape = 'u32[144,128]{1,0:T(1,128)}', space=vmem, size = 0x12000, scoped, tag = 'internal scratch']
  %s0 = inlined_call_operand.vmem [shape: bf16[16,32,128], index: 0, kind: input, shape index: {}]
  %s1 = inlined_call_operand.vmem [shape: bf16[128,384], index: 1, kind: input, shape index: {}]
  %s2 = inlined_call_operand.vmem [shape: f32[1,128], index: 2, kind: input, shape index: {}]
  %s3 = inlined_call_operand.vmem [shape: bf16[128,384], index: 3, kind: input, shape index: {}]
  %s4 = inlined_call_operand.vmem [shape: f32[1,128], index: 4, kind: input, shape index: {}]
  %s5 = inlined_call_operand.vmem [shape: bf16[4,128,128], index: 5, kind: input, shape index: {}]
  %s6 = inlined_call_operand.vmem [shape: f32[1,128], index: 6, kind: input, shape index: {}]
  %s7 = inlined_call_operand.vmem [shape: f32[32,128], index: 7, kind: output, shape index: {}]
  %s8 = sld [smem:[#allocation0]]
  $region102: #{bert_cnn_classifier_forward.1} parent=0
    _
  %s10 = ssub.s32 1, %s8
  %s11 = scalar_select 0, %s10, %s8
  $region1: #{bert_cnn_classifier_forward.1} parent=0
    #allocation2 [shape = 'u8[131072]{0}', space=vmem, size = 0x20000, scoped, tag = 'input window, operand 0']
    loop: start=0, step=1, limit=4
    $region2: #{bert_cnn_classifier_forward.1} parent=1 // loop_pre_header
      _
    $region3: #{bert_cnn_classifier_forward.1} parent=1 // loop_header
      %s13 = sphi 0, %s17
      %p14 = scmp.ge.s32.totalorder %s13, 4
      %s23 = sphi 0, %s25
      %s26 = sphi 0, %s23
      %s27 = sphi 0, %s26
      %s43 = sphi 0, %s27
      %s47 = sphi 0, %s47
      %s49 = sphi 0, %s47
      %s50 = sphi 0, %s49
      %s64 = sphi 0, %s50
      %s68 = sphi 0, %s68
      %s70 = sphi 0, %s68
      %s71 = sphi 0, %s70
      %s85 = sphi 0, %s71
      %s89 = sphi 0, %s89
      %s91 = sphi 0, %s89
      %s92 = sphi 0, %s91
      %s106 = sphi 0, %s92
      %s110 = sphi 0, %s110
      %s112 = sphi 0, %s110
      %s113 = sphi 0, %s112
      %s127 = sphi 0, %s113
      %s131 = sphi 0, %s131
      %s133 = sphi 0, %s131
      %s134 = sphi 0, %s133
      %s148 = sphi 0, %s134
      %s152 = sphi 0, %s152
      %s154 = sphi 0, %s152
      %s155 = sphi 0, %s154
      %s169 = sphi 0, %s155
      %s175 = sphi 0, %s177
      %s178 = sphi 0, %s175
      %s179 = sphi 0, %s178
      %s195 = sphi 0, %s179
    $region4: #{bert_cnn_classifier_forward.1} parent=1 // loop_header_branch
      %16 = sbr.rel (%p14) target = $region8
    $region5: #{bert_cnn_classifier_forward.1} parent=1 // loop_body
      %s18 = ssub.s32 %s13, 1
      %s19 = ssub.s32 %s13, 2
      %s20 = sadd.s32 %s13, 1
      %s21 = ssub.s32 %s13, %s20
      %p22 = scmp.eq.s32.totalorder %s21, 0
      %s24 = sadd.s32 %s23, 1
      %s25 = scalar_select %p22, %s23, %s24
      %p28 = pneg %p22
      %p29 = scmp.eq.s32.totalorder %s13, 1
      %p30 = por %p28, %p29
      %p31 = scmp.ne.s32.totalorder %s23, %s26
      %p32 = scmp.eq.s32.totalorder %s13, 0
      %p33 = por %p31, %p32
      %p34 = scmp.ne.s32.totalorder %s23, %s26
      %p35 = scmp.eq.s32.totalorder %s18, 1
      %p36 = por %p34, %p35
      %p37 = scmp.ne.s32.totalorder %s26, %s27
      %p38 = scmp.eq.s32.totalorder %s18, 0
      %p39 = por %p37, %p38
      %p40 = scmp.ne.s32.totalorder %s26, %s27
      %p41 = scmp.eq.s32.totalorder %s19, 1
      %p42 = por %p40, %p41
      %p44 = scmp.ne.s32.totalorder %s27, %s43
      %p45 = scmp.eq.s32.totalorder %s19, 0
      %p46 = por %p44, %p45
      %s48 = sadd.s32 %s47, 1
      %p51 = scmp.eq.s32.totalorder %s13, 1
      %p52 = scmp.ne.s32.totalorder %s47, %s49
      %p53 = scmp.eq.s32.totalorder %s13, 0
      %p54 = por %p52, %p53
      %p55 = scmp.ne.s32.totalorder %s47, %s49
      %p56 = scmp.eq.s32.totalorder %s18, 1
      %p57 = por %p55, %p56
      %p58 = scmp.ne.s32.totalorder %s49, %s50
      %p59 = scmp.eq.s32.totalorder %s18, 0
      %p60 = por %p58, %p59
      %p61 = scmp.ne.s32.totalorder %s49, %s50
      %p62 = scmp.eq.s32.totalorder %s19, 1
      %p63 = por %p61, %p62
      %p65 = scmp.ne.s32.totalorder %s50, %s64
      %p66 = scmp.eq.s32.totalorder %s19, 0
      %p67 = por %p65, %p66
      %s69 = sadd.s32 %s68, 1
      %p72 = scmp.eq.s32.totalorder %s13, 1
      %p73 = scmp.ne.s32.totalorder %s68, %s70
      %p74 = scmp.eq.s32.totalorder %s13, 0
      %p75 = por %p73, %p74
      %p76 = scmp.ne.s32.totalorder %s68, %s70
      %p77 = scmp.eq.s32.totalorder %s18, 1
      %p78 = por %p76, %p77
      %p79 = scmp.ne.s32.totalorder %s70, %s71
      %p80 = scmp.eq.s32.totalorder %s18, 0
      %p81 = por %p79, %p80
      %p82 = scmp.ne.s32.totalorder %s70, %s71
      %p83 = scmp.eq.s32.totalorder %s19, 1
      %p84 = por %p82, %p83
      %p86 = scmp.ne.s32.totalorder %s71, %s85
      %p87 = scmp.eq.s32.totalorder %s19, 0
      %p88 = por %p86, %p87
      %s90 = sadd.s32 %s89, 1
      %p93 = scmp.eq.s32.totalorder %s13, 1
      %p94 = scmp.ne.s32.totalorder %s89, %s91
      %p95 = scmp.eq.s32.totalorder %s13, 0
      %p96 = por %p94, %p95
      %p97 = scmp.ne.s32.totalorder %s89, %s91
      %p98 = scmp.eq.s32.totalorder %s18, 1
      %p99 = por %p97, %p98
      %p100 = scmp.ne.s32.totalorder %s91, %s92
      %p101 = scmp.eq.s32.totalorder %s18, 0
      %p102 = por %p100, %p101
      %p103 = scmp.ne.s32.totalorder %s91, %s92
      %p104 = scmp.eq.s32.totalorder %s19, 1
      %p105 = por %p103, %p104
      %p107 = scmp.ne.s32.totalorder %s92, %s106
      %p108 = scmp.eq.s32.totalorder %s19, 0
      %p109 = por %p107, %p108
      %s111 = sadd.s32 %s110, 1
      %p114 = scmp.eq.s32.totalorder %s13, 1
      %p115 = scmp.ne.s32.totalorder %s110, %s112
      %p116 = scmp.eq.s32.totalorder %s13, 0
      %p117 = por %p115, %p116
      %p118 = scmp.ne.s32.totalorder %s110, %s112
      %p119 = scmp.eq.s32.totalorder %s18, 1
      %p120 = por %p118, %p119
      %p121 = scmp.ne.s32.totalorder %s112, %s113
      %p122 = scmp.eq.s32.totalorder %s18, 0
      %p123 = por %p121, %p122
      %p124 = scmp.ne.s32.totalorder %s112, %s113
      %p125 = scmp.eq.s32.totalorder %s19, 1
      %p126 = por %p124, %p125
      %p128 = scmp.ne.s32.totalorder %s113, %s127
      %p129 = scmp.eq.s32.totalorder %s19, 0
      %p130 = por %p128, %p129
      %s132 = sadd.s32 %s131, 1
      %p135 = scmp.eq.s32.totalorder %s13, 1
      %p136 = scmp.ne.s32.totalorder %s131, %s133
      %p137 = scmp.eq.s32.totalorder %s13, 0
      %p138 = por %p136, %p137
      %p139 = scmp.ne.s32.totalorder %s131, %s133
      %p140 = scmp.eq.s32.totalorder %s18, 1
      %p141 = por %p139, %p140
      %p142 = scmp.ne.s32.totalorder %s133, %s134
      %p143 = scmp.eq.s32.totalorder %s18, 0
      %p144 = por %p142, %p143
      %p145 = scmp.ne.s32.totalorder %s133, %s134
      %p146 = scmp.eq.s32.totalorder %s19, 1
      %p147 = por %p145, %p146
      %p149 = scmp.ne.s32.totalorder %s134, %s148
      %p150 = scmp.eq.s32.totalorder %s19, 0
      %p151 = por %p149, %p150
      %s153 = sadd.s32 %s152, 1
      %p156 = scmp.eq.s32.totalorder %s13, 1
      %p157 = scmp.ne.s32.totalorder %s152, %s154
      %p158 = scmp.eq.s32.totalorder %s13, 0
      %p159 = por %p157, %p158
      %p160 = scmp.ne.s32.totalorder %s152, %s154
      %p161 = scmp.eq.s32.totalorder %s18, 1
      %p162 = por %p160, %p161
      %p163 = scmp.ne.s32.totalorder %s154, %s155
      %p164 = scmp.eq.s32.totalorder %s18, 0
      %p165 = por %p163, %p164
      %p166 = scmp.ne.s32.totalorder %s154, %s155
      %p167 = scmp.eq.s32.totalorder %s19, 1
      %p168 = por %p166, %p167
      %p170 = scmp.ne.s32.totalorder %s155, %s169
      %p171 = scmp.eq.s32.totalorder %s19, 0
      %p172 = por %p170, %p171
      %s173 = ssub.s32 %s13, %s20
      %p174 = scmp.eq.s32.totalorder %s173, 0
      %s176 = sadd.s32 %s175, 1
      %s177 = scalar_select %p174, %s175, %s176
      %p180 = pneg %p174
      %p181 = scmp.eq.s32.totalorder %s13, 1
      %p182 = por %p180, %p181
      %p183 = scmp.ne.s32.totalorder %s175, %s178
      %p184 = scmp.eq.s32.totalorder %s13, 0
      %p185 = por %p183, %p184
      %p186 = scmp.ne.s32.totalorder %s175, %s178
      %p187 = scmp.eq.s32.totalorder %s18, 1
      %p188 = por %p186, %p187
      %p189 = scmp.ne.s32.totalorder %s178, %s179
      %p190 = scmp.eq.s32.totalorder %s18, 0
      %p191 = por %p189, %p190
      %p192 = scmp.ne.s32.totalorder %s178, %s179
      %p193 = scmp.eq.s32.totalorder %s19, 1
      %p194 = por %p192, %p193
      %p196 = scmp.ne.s32.totalorder %s179, %s195
      %p197 = scmp.eq.s32.totalorder %s19, 0
      %p198 = por %p196, %p197
      %p199 = scmp.le.s32.totalorder 1, %s13
      %p200 = scmp.lt.s32.totalorder %s13, 3
      %p201 = pnand %p199, %p200
      %p202 = pneg %p201
      // Predicated region
      $region9: #{bert_cnn_classifier_forward.1} parent=5 // pred_check
        _
      $region10: #{bert_cnn_classifier_forward.1} parent=5 // pred_check_branch
        %204 = sbr.rel (%p201) target = $region12
      $region11: #{bert_cnn_classifier_forward.1} parent=5 // pred_region
        %s205 = ssub.s32 %s13, 1
        // Predicated region
        $region13: #{bert_cnn_classifier_forward.1} parent=11 // pred_check
          %p206 = pneg %p60
        $region14: #{bert_cnn_classifier_forward.1} parent=11 // pred_check_branch
          %208 = sbr.rel (%p206) target = $region16
        $region15: #{bert_cnn_classifier_forward.1} parent=11 // pred_region
          _
        $region16: #{bert_cnn_classifier_forward.1} parent=11 // pred_fallthru
          _
        // Predicated region
        $region17: #{bert_cnn_classifier_forward.1} parent=11 // pred_check
          %p209 = pneg %p81
        $region18: #{bert_cnn_classifier_forward.1} parent=11 // pred_check_branch
          %211 = sbr.rel (%p209) target = $region20
        $region19: #{bert_cnn_classifier_forward.1} parent=11 // pred_region
          _
        $region20: #{bert_cnn_classifier_forward.1} parent=11 // pred_fallthru
          _
        // Predicated region
        $region21: #{bert_cnn_classifier_forward.1} parent=11 // pred_check
          %p212 = pneg %p102
        $region22: #{bert_cnn_classifier_forward.1} parent=11 // pred_check_branch
          %214 = sbr.rel (%p212) target = $region24
        $region23: #{bert_cnn_classifier_forward.1} parent=11 // pred_region
          _
        $region24: #{bert_cnn_classifier_forward.1} parent=11 // pred_fallthru
          _
        // Predicated region
        $region25: #{bert_cnn_classifier_forward.1} parent=11 // pred_check
          %p215 = pneg %p123
        $region26: #{bert_cnn_classifier_forward.1} parent=11 // pred_check_branch
          %217 = sbr.rel (%p215) target = $region28
        $region27: #{bert_cnn_classifier_forward.1} parent=11 // pred_region
          _
        $region28: #{bert_cnn_classifier_forward.1} parent=11 // pred_fallthru
          _
        // Predicated region
        $region29: #{bert_cnn_classifier_forward.1} parent=11 // pred_check
          %p218 = pneg %p144
        $region30: #{bert_cnn_classifier_forward.1} parent=11 // pred_check_branch
          %220 = sbr.rel (%p218) target = $region32
        $region31: #{bert_cnn_classifier_forward.1} parent=11 // pred_region
          _
        $region32: #{bert_cnn_classifier_forward.1} parent=11 // pred_fallthru
          _
        // Predicated region
        $region33: #{bert_cnn_classifier_forward.1} parent=11 // pred_check
          %p221 = pneg %p165
        $region34: #{bert_cnn_classifier_forward.1} parent=11 // pred_check_branch
          %223 = sbr.rel (%p221) target = $region36
        $region35: #{bert_cnn_classifier_forward.1} parent=11 // pred_region
          _
        $region36: #{bert_cnn_classifier_forward.1} parent=11 // pred_fallthru
          _
      $region12: #{bert_cnn_classifier_forward.1} parent=5 // pred_fallthru
        _
      %p224 = scmp.lt.s32.totalorder %s13, 2
      // Predicated region
      $region37: #{bert_cnn_classifier_forward.1} parent=5 // pred_check
        %p225 = pneg %p224
      $region38: #{bert_cnn_classifier_forward.1} parent=5 // pred_check_branch
        %227 = sbr.rel (%p225) target = $region40
      $region39: #{bert_cnn_classifier_forward.1} parent=5 // pred_region
        // Predicated region
        $region41: #{bert_cnn_classifier_forward.1} parent=39 // pred_check
          %p228 = pneg %p33
        $region42: #{bert_cnn_classifier_forward.1} parent=39 // pred_check_branch
          %230 = sbr.rel (%p228) target = $region44
        $region43: #{bert_cnn_classifier_forward.1} parent=39 // pred_region
          %s231 = sand.u32 %s23, 1
          %s232 = sand.u32 %s23, 1
          %s233 = smul.addr %s232, 128
          %s234 = scalar_lea.vmem [#allocation2], %s233
          %s235 = smul.u32 2, %s13
          %s236 = smul.addr %s235, 4
          %s237 = scalar_lea.vmem %s0, %s236
          // Predicated region
          $region45: #{bert_cnn_classifier_forward.1} parent=43 // pred_check
            _
          $region46: #{bert_cnn_classifier_forward.1} parent=43 // pred_check_branch
            %239 = sbr.rel (0) target = $region48
          $region47: #{bert_cnn_classifier_forward.1} parent=43 // pred_region
            // Predicated region
            $region49: #{bert_cnn_classifier_forward.1} parent=47 // pred_check
              _
            $region50: #{bert_cnn_classifier_forward.1} parent=47 // pred_check_branch
              %241 = sbr.rel target = $region52
            $region51: #{bert_cnn_classifier_forward.1} parent=47 // pred_region
              // Predicated region
              $region64: #{bert_cnn_classifier_forward.1} parent=51 // pred_check
                _
              $region65: #{bert_cnn_classifier_forward.1} parent=51 // pred_check_branch
                %318 = sbr.rel (0) target = $region67
              $region66: #{bert_cnn_classifier_forward.1} parent=51 // pred_region
                loop: start=0, step=1, limit=1
                $region68: #{bert_cnn_classifier_forward.1} parent=66 // loop_pre_header
                  _
                $region69: #{bert_cnn_classifier_forward.1} parent=66 // loop_header
                  %s320 = sphi 0, %s324
                  %p321 = scmp.ge.s32.totalorder %s320, 1
                  %s325 = sphi %s237, %s237
                  %s326 = sphi %s234, %s234
                $region70: #{bert_cnn_classifier_forward.1} parent=66 // loop_header_branch
                  %323 = sbr.rel (%p321) target = $region74
                $region71: #{bert_cnn_classifier_forward.1} parent=66 // loop_body
                  _
                $region72: #{bert_cnn_classifier_forward.1} parent=66 // loop_footer
                  %s324 = sadd.s32 1, %s320
                $region73: #{bert_cnn_classifier_forward.1} parent=66 // loop_footer_branch
                  %319 = sbr.rel target = $region69
                $region74: #{bert_cnn_classifier_forward.1} parent=66 // loop_exit
                  _
                loop: start=0, step=1, limit=1
                $region75: #{bert_cnn_classifier_forward.1} parent=66 // loop_pre_header
                  _
                $region76: #{bert_cnn_classifier_forward.1} parent=66 // loop_header
                  %s329 = sphi 0, %s333
                  %p330 = scmp.ge.s32.totalorder %s329, 1
                  %s334 = sphi %s237, %s237
                  %s335 = sphi %s234, %s234
                $region77: #{bert_cnn_classifier_forward.1} parent=66 // loop_header_branch
                  %332 = sbr.rel (%p330) target = $region81
                $region78: #{bert_cnn_classifier_forward.1} parent=66 // loop_body
                  %v336 = vld [vmem:[%s334] sm:$0xf]
                  %337 = vst [vmem:[%s335] sm:$0xf] %v336
                  %v338 = vld [vmem:[%s334 + $0x4] sm:$0xf]
                  %339 = vst [vmem:[%s335 + $0x4] sm:$0xf] %v338
                  %v340 = vld [vmem:[%s334 + $0x10] sm:$0xf]
                  %341 = vst [vmem:[%s335 + $0x8] sm:$0xf] %v340
                  %v342 = vld [vmem:[%s334 + $0x14] sm:$0xf]
                  %343 = vst [vmem:[%s335 + $0xc] sm:$0xf] %v342
                  %v344 = vld [vmem:[%s334 + $0x20] sm:$0xf]
                  %345 = vst [vmem:[%s335 + $0x10] sm:$0xf] %v344
                  %v346 = vld [vmem:[%s334 + $0x24] sm:$0xf]
                  %347 = vst [vmem:[%s335 + $0x14] sm:$0xf] %v346
                  %v348 = vld [vmem:[%s334 + $0x30] sm:$0xf]
                  %349 = vst [vmem:[%s335 + $0x18] sm:$0xf] %v348
                  %v350 = vld [vmem:[%s334 + $0x34] sm:$0xf]
                  %351 = vst [vmem:[%s335 + $0x1c] sm:$0xf] %v350
                  %v352 = vld [vmem:[%s334 + $0x40] sm:$0xf]
                  %353 = vst [vmem:[%s335 + $0x20] sm:$0xf] %v352
                  %v354 = vld [vmem:[%s334 + $0x44] sm:$0xf]
                  %355 = vst [vmem:[%s335 + $0x24] sm:$0xf] %v354
                  %v356 = vld [vmem:[%s334 + $0x50] sm:$0xf]
                  %357 = vst [vmem:[%s335 + $0x28] sm:$0xf] %v356
                  %v358 = vld [vmem:[%s334 + $0x54] sm:$0xf]
                  %359 = vst [vmem:[%s335 + $0x2c] sm:$0xf] %v358
                  %v360 = vld [vmem:[%s334 + $0x60] sm:$0xf]
                  %361 = vst [vmem:[%s335 + $0x30] sm:$0xf] %v360
                  %v362 = vld [vmem:[%s334 + $0x64] sm:$0xf]
                  %363 = vst [vmem:[%s335 + $0x34] sm:$0xf] %v362
                  %v364 = vld [vmem:[%s334 + $0x70] sm:$0xf]
                  %365 = vst [vmem:[%s335 + $0x38] sm:$0xf] %v364
                  %v366 = vld [vmem:[%s334 + $0x74] sm:$0xf]
                  %367 = vst [vmem:[%s335 + $0x3c] sm:$0xf] %v366
                  %v368 = vld [vmem:[%s334 + $0x80] sm:$0xf]
                  %369 = vst [vmem:[%s335 + $0x40] sm:$0xf] %v368
                  %v370 = vld [vmem:[%s334 + $0x84] sm:$0xf]
                  %371 = vst [vmem:[%s335 + $0x44] sm:$0xf] %v370
                  %v372 = vld [vmem:[%s334 + $0x90] sm:$0xf]
                  %373 = vst [vmem:[%s335 + $0x48] sm:$0xf] %v372
                  %v374 = vld [vmem:[%s334 + $0x94] sm:$0xf]
                  %375 = vst [vmem:[%s335 + $0x4c] sm:$0xf] %v374
                  %v376 = vld [vmem:[%s334 + $0xa0] sm:$0xf]
                  %377 = vst [vmem:[%s335 + $0x50] sm:$0xf] %v376
                  %v378 = vld [vmem:[%s334 + $0xa4] sm:$0xf]
                  %379 = vst [vmem:[%s335 + $0x54] sm:$0xf] %v378
                  %v380 = vld [vmem:[%s334 + $0xb0] sm:$0xf]
                  %381 = vst [vmem:[%s335 + $0x58] sm:$0xf] %v380
                  %v382 = vld [vmem:[%s334 + $0xb4] sm:$0xf]
                  %383 = vst [vmem:[%s335 + $0x5c] sm:$0xf] %v382
                  %v384 = vld [vmem:[%s334 + $0xc0] sm:$0xf]
                  %385 = vst [vmem:[%s335 + $0x60] sm:$0xf] %v384
                  %v386 = vld [vmem:[%s334 + $0xc4] sm:$0xf]
                  %387 = vst [vmem:[%s335 + $0x64] sm:$0xf] %v386
                  %v388 = vld [vmem:[%s334 + $0xd0] sm:$0xf]
                  %389 = vst [vmem:[%s335 + $0x68] sm:$0xf] %v388
                  %v390 = vld [vmem:[%s334 + $0xd4] sm:$0xf]
                  %391 = vst [vmem:[%s335 + $0x6c] sm:$0xf] %v390
                  %v392 = vld [vmem:[%s334 + $0xe0] sm:$0xf]
                  %393 = vst [vmem:[%s335 + $0x70] sm:$0xf] %v392
                  %v394 = vld [vmem:[%s334 + $0xe4] sm:$0xf]
                  %395 = vst [vmem:[%s335 + $0x74] sm:$0xf] %v394
                  %v396 = vld [vmem:[%s334 + $0xf0] sm:$0xf]
                  %397 = vst [vmem:[%s335 + $0x78] sm:$0xf] %v396
                  %v398 = vld [vmem:[%s334 + $0xf4] sm:$0xf]
                  %399 = vst [vmem:[%s335 + $0x7c] sm:$0xf] %v398
                $region79: #{bert_cnn_classifier_forward.1} parent=66 // loop_footer
                  %s333 = sadd.s32 1, %s329
                $region80: #{bert_cnn_classifier_forward.1} parent=66 // loop_footer_branch
                  %328 = sbr.rel target = $region76
                $region81: #{bert_cnn_classifier_forward.1} parent=66 // loop_exit
                  _
              $region67: #{bert_cnn_classifier_forward.1} parent=51 // pred_fallthru
                _
            $region52: #{bert_cnn_classifier_forward.1} parent=47 // pred_fallthru
              _
            // Predicated region
            $region53: #{bert_cnn_classifier_forward.1} parent=47 // pred_check
              _
            $region54: #{bert_cnn_classifier_forward.1} parent=47 // pred_check_branch
              %243 = sbr.rel (0) target = $region56
            $region55: #{bert_cnn_classifier_forward.1} parent=47 // pred_region
              loop: start=0, step=1, limit=1
              $region57: #{bert_cnn_classifier_forward.1} parent=55 // loop_pre_header
                _
              $region58: #{bert_cnn_classifier_forward.1} parent=55 // loop_header
                %s246 = sphi 0, %s250
                %p247 = scmp.ge.s32.totalorder %s246, 1
                %s251 = sphi %s237, %s237
                %s252 = sphi %s234, %s234
              $region59: #{bert_cnn_classifier_forward.1} parent=55 // loop_header_branch
                %249 = sbr.rel (%p247) target = $region63
              $region60: #{bert_cnn_classifier_forward.1} parent=55 // loop_body
                %v253 = vld [vmem:[%s251] sm:$0xf]
                %254 = vst [vmem:[%s252] sm:$0xf] %v253
                %v255 = vld [vmem:[%s251 + $0x4] sm:$0xf]
                %256 = vst [vmem:[%s252 + $0x4] sm:$0xf] %v255
                %v257 = vld [vmem:[%s251 + $0x10] sm:$0xf]
                %258 = vst [vmem:[%s252 + $0x8] sm:$0xf] %v257
                %v259 = vld [vmem:[%s251 + $0x14] sm:$0xf]
                %260 = vst [vmem:[%s252 + $0xc] sm:$0xf] %v259
                %v261 = vld [vmem:[%s251 + $0x20] sm:$0xf]
                %262 = vst [vmem:[%s252 + $0x10] sm:$0xf] %v261
                %v263 = vld [vmem:[%s251 + $0x24] sm:$0xf]
                %264 = vst [vmem:[%s252 + $0x14] sm:$0xf] %v263
                %v265 = vld [vmem:[%s251 + $0x30] sm:$0xf]
                %266 = vst [vmem:[%s252 + $0x18] sm:$0xf] %v265
                %v267 = vld [vmem:[%s251 + $0x34] sm:$0xf]
                %268 = vst [vmem:[%s252 + $0x1c] sm:$0xf] %v267
                %v269 = vld [vmem:[%s251 + $0x40] sm:$0xf]
                %270 = vst [vmem:[%s252 + $0x20] sm:$0xf] %v269
                %v271 = vld [vmem:[%s251 + $0x44] sm:$0xf]
                %272 = vst [vmem:[%s252 + $0x24] sm:$0xf] %v271
                %v273 = vld [vmem:[%s251 + $0x50] sm:$0xf]
                %274 = vst [vmem:[%s252 + $0x28] sm:$0xf] %v273
                %v275 = vld [vmem:[%s251 + $0x54] sm:$0xf]
                %276 = vst [vmem:[%s252 + $0x2c] sm:$0xf] %v275
                %v277 = vld [vmem:[%s251 + $0x60] sm:$0xf]
                %278 = vst [vmem:[%s252 + $0x30] sm:$0xf] %v277
                %v279 = vld [vmem:[%s251 + $0x64] sm:$0xf]
                %280 = vst [vmem:[%s252 + $0x34] sm:$0xf] %v279
                %v281 = vld [vmem:[%s251 + $0x70] sm:$0xf]
                %282 = vst [vmem:[%s252 + $0x38] sm:$0xf] %v281
                %v283 = vld [vmem:[%s251 + $0x74] sm:$0xf]
                %284 = vst [vmem:[%s252 + $0x3c] sm:$0xf] %v283
                %v285 = vld [vmem:[%s251 + $0x80] sm:$0xf]
                %286 = vst [vmem:[%s252 + $0x40] sm:$0xf] %v285
                %v287 = vld [vmem:[%s251 + $0x84] sm:$0xf]
                %288 = vst [vmem:[%s252 + $0x44] sm:$0xf] %v287
                %v289 = vld [vmem:[%s251 + $0x90] sm:$0xf]
                %290 = vst [vmem:[%s252 + $0x48] sm:$0xf] %v289
                %v291 = vld [vmem:[%s251 + $0x94] sm:$0xf]
                %292 = vst [vmem:[%s252 + $0x4c] sm:$0xf] %v291
                %v293 = vld [vmem:[%s251 + $0xa0] sm:$0xf]
                %294 = vst [vmem:[%s252 + $0x50] sm:$0xf] %v293
                %v295 = vld [vmem:[%s251 + $0xa4] sm:$0xf]
                %296 = vst [vmem:[%s252 + $0x54] sm:$0xf] %v295
                %v297 = vld [vmem:[%s251 + $0xb0] sm:$0xf]
                %298 = vst [vmem:[%s252 + $0x58] sm:$0xf] %v297
                %v299 = vld [vmem:[%s251 + $0xb4] sm:$0xf]
                %300 = vst [vmem:[%s252 + $0x5c] sm:$0xf] %v299
                %v301 = vld [vmem:[%s251 + $0xc0] sm:$0xf]
                %302 = vst [vmem:[%s252 + $0x60] sm:$0xf] %v301
                %v303 = vld [vmem:[%s251 + $0xc4] sm:$0xf]
                %304 = vst [vmem:[%s252 + $0x64] sm:$0xf] %v303
                %v305 = vld [vmem:[%s251 + $0xd0] sm:$0xf]
                %306 = vst [vmem:[%s252 + $0x68] sm:$0xf] %v305
                %v307 = vld [vmem:[%s251 + $0xd4] sm:$0xf]
                %308 = vst [vmem:[%s252 + $0x6c] sm:$0xf] %v307
                %v309 = vld [vmem:[%s251 + $0xe0] sm:$0xf]
                %310 = vst [vmem:[%s252 + $0x70] sm:$0xf] %v309
                %v311 = vld [vmem:[%s251 + $0xe4] sm:$0xf]
                %312 = vst [vmem:[%s252 + $0x74] sm:$0xf] %v311
                %v313 = vld [vmem:[%s251 + $0xf0] sm:$0xf]
                %314 = vst [vmem:[%s252 + $0x78] sm:$0xf] %v313
                %v315 = vld [vmem:[%s251 + $0xf4] sm:$0xf]
                %316 = vst [vmem:[%s252 + $0x7c] sm:$0xf] %v315
              $region61: #{bert_cnn_classifier_forward.1} parent=55 // loop_footer
                %s250 = sadd.s32 1, %s246
              $region62: #{bert_cnn_classifier_forward.1} parent=55 // loop_footer_branch
                %245 = sbr.rel target = $region58
              $region63: #{bert_cnn_classifier_forward.1} parent=55 // loop_exit
                _
            $region56: #{bert_cnn_classifier_forward.1} parent=47 // pred_fallthru
              _
          $region48: #{bert_cnn_classifier_forward.1} parent=43 // pred_fallthru
            _
          %400 = vnop
        $region44: #{bert_cnn_classifier_forward.1} parent=39 // pred_fallthru
          _
      $region40: #{bert_cnn_classifier_forward.1} parent=5 // pred_fallthru
        _
      %p401 = scmp.le.s32.totalorder 1, %s13
      %p402 = scmp.lt.s32.totalorder %s13, 3
      %p403 = pnand %p401, %p402
      %p404 = pneg %p403
      // Predicated region
      $region82: #{bert_cnn_classifier_forward.1} parent=5 // pred_check
        _
      $region83: #{bert_cnn_classifier_forward.1} parent=5 // pred_check_branch
        %406 = sbr.rel (%p403) target = $region85
      $region84: #{bert_cnn_classifier_forward.1} parent=5 // pred_region
        %s407 = ssub.s32 %s13, 1
        %s408 = sand.u32 %s26, 1
        %s409 = sand.u32 %s26, 1
        %s410 = smul.addr %s409, 128
        %s411 = scalar_lea.vmem [#allocation2], %s410
        // Predicated region
        $region86: #{bert_cnn_classifier_forward.1} parent=84 // pred_check
          %p412 = pneg %p39
        $region87: #{bert_cnn_classifier_forward.1} parent=84 // pred_check_branch
          %414 = sbr.rel (%p412) target = $region89
        $region88: #{bert_cnn_classifier_forward.1} parent=84 // pred_region
          _
        $region89: #{bert_cnn_classifier_forward.1} parent=84 // pred_fallthru
          _
        %s415 = sand.u32 %s26, 1
        %s416 = sand.u32 %s26, 1
        %s417 = smul.addr %s416, 128
        %s418 = scalar_lea.vmem [#allocation2], %s417
        %p419 = pneg %p39
        %p420 = pneg %p36
        %p421 = pneg %p60
        %p422 = pneg %p57
        %p423 = pneg %p81
        %p424 = pneg %p78
        %p425 = pneg %p102
        %p426 = pneg %p99
        %p427 = pneg %p123
        %p428 = pneg %p120
        %p429 = pneg %p144
        %p430 = pneg %p141
        %p431 = pneg %p165
        %p432 = pneg %p162
        %p433 = pneg %p191
        %p434 = pneg %p188
        %s435 = smul.u32 2, %s18
        %p436 = scmp.lt.s32.totalorder %s435, 3
        %s437 = scalar_select %p436, %s435, 3
        %s438 = smul.addr %s437, 8
        %s439 = scalar_lea.vmem %s7, %s438
        %s440 = smul.u32 2, %s18
        %s441 = smul.u32 2, %s18
        %p442 = scmp.lt.s32.totalorder %s441, 3
        %s443 = scalar_select %p442, %s441, 3
        %s444 = smul.addr %s443, 8
        %s445 = scalar_lea.vmem %s7, %s444
        %s446 = smul.u32 2, %s18
        %v448 = vld [vmem:[%s411] sm:$0xf]
        %v449 = vld [vmem:[%s411 + $0x4] sm:$0xf]
        %v450 = vld [vmem:[%s411 + $0x8] sm:$0xf]
        %v451 = vld [vmem:[%s411 + $0xc] sm:$0xf]
        %v452 = vld [vmem:[%s411 + $0x10] sm:$0xf]
        %v453 = vld [vmem:[%s411 + $0x14] sm:$0xf]
        %v454 = vld [vmem:[%s411 + $0x18] sm:$0xf]
        %v455 = vld [vmem:[%s411 + $0x1c] sm:$0xf]
        %v456 = vld [vmem:[%s411 + $0x20] sm:$0xf]
        %v457 = vld [vmem:[%s411 + $0x24] sm:$0xf]
        %v458 = vld [vmem:[%s411 + $0x28] sm:$0xf]
        %v459 = vld [vmem:[%s411 + $0x2c] sm:$0xf]
        %v460 = vld [vmem:[%s411 + $0x30] sm:$0xf]
        %v461 = vld [vmem:[%s411 + $0x34] sm:$0xf]
        %v462 = vld [vmem:[%s411 + $0x38] sm:$0xf]
        %v463 = vld [vmem:[%s411 + $0x3c] sm:$0xf]
        %v464 = vld [vmem:[%s411 + $0x40] sm:$0xf]
        %v465 = vld [vmem:[%s411 + $0x44] sm:$0xf]
        %v466 = vld [vmem:[%s411 + $0x48] sm:$0xf]
        %v467 = vld [vmem:[%s411 + $0x4c] sm:$0xf]
        %v468 = vld [vmem:[%s411 + $0x50] sm:$0xf]
        %v469 = vld [vmem:[%s411 + $0x54] sm:$0xf]
        %v470 = vld [vmem:[%s411 + $0x58] sm:$0xf]
        %v471 = vld [vmem:[%s411 + $0x5c] sm:$0xf]
        %v472 = vld [vmem:[%s411 + $0x60] sm:$0xf]
        %v473 = vld [vmem:[%s411 + $0x64] sm:$0xf]
        %v474 = vld [vmem:[%s411 + $0x68] sm:$0xf]
        %v475 = vld [vmem:[%s411 + $0x6c] sm:$0xf]
        %v476 = vld [vmem:[%s411 + $0x70] sm:$0xf]
        %v477 = vld [vmem:[%s411 + $0x74] sm:$0xf]
        %v478 = vld [vmem:[%s411 + $0x78] sm:$0xf]
        %v479 = vld [vmem:[%s411 + $0x7c] sm:$0xf]
        %v480 = vld [vmem:[%s1] sm:$0xff]
        %v481 = vld [vmem:[%s1 + $0x8] sm:$0xf]
        %v482 = vld [vmem:[%s1 + $0xc] sm:$0xff]
        %v483 = vld [vmem:[%s1 + $0x14] sm:$0xf]
        %v484 = vld [vmem:[%s1 + $0x18] sm:$0xff]
        %v485 = vld [vmem:[%s1 + $0x20] sm:$0xf]
        %v486 = vld [vmem:[%s1 + $0x24] sm:$0xff]
        %v487 = vld [vmem:[%s1 + $0x2c] sm:$0xf]
        %v488 = vld [vmem:[%s1 + $0x30] sm:$0xff]
        %v489 = vld [vmem:[%s1 + $0x38] sm:$0xf]
        %v490 = vld [vmem:[%s1 + $0x3c] sm:$0xff]
        %v491 = vld [vmem:[%s1 + $0x44] sm:$0xf]
        %v492 = vld [vmem:[%s1 + $0x48] sm:$0xff]
        %v493 = vld [vmem:[%s1 + $0x50] sm:$0xf]
        %v494 = vld [vmem:[%s1 + $0x54] sm:$0xff]
        %v495 = vld [vmem:[%s1 + $0x5c] sm:$0xf]
        %v496 = vld [vmem:[%s1 + $0x60] sm:$0xff]
        %v497 = vld [vmem:[%s1 + $0x68] sm:$0xf]
        %v498 = vld [vmem:[%s1 + $0x6c] sm:$0xff]
        %v499 = vld [vmem:[%s1 + $0x74] sm:$0xf]
        %v500 = vld [vmem:[%s1 + $0x78] sm:$0xff]
        %v501 = vld [vmem:[%s1 + $0x80] sm:$0xf]
        %v502 = vld [vmem:[%s1 + $0x84] sm:$0xff]
        %v503 = vld [vmem:[%s1 + $0x8c] sm:$0xf]
        %v504 = vld [vmem:[%s1 + $0x90] sm:$0xff]
        %v505 = vld [vmem:[%s1 + $0x98] sm:$0xf]
        %v506 = vld [vmem:[%s1 + $0x9c] sm:$0xff]
        %v507 = vld [vmem:[%s1 + $0xa4] sm:$0xf]
        %v508 = vld [vmem:[%s1 + $0xa8] sm:$0xff]
        %v509 = vld [vmem:[%s1 + $0xb0] sm:$0xf]
        %v510 = vld [vmem:[%s1 + $0xb4] sm:$0xff]
        %v511 = vld [vmem:[%s1 + $0xbc] sm:$0xf]
        %v544 = vunpack.c.l.b16 %v448
        %v545 = vunpack.c.l.b16 %v449
        %v546 = vunpack.c.l.b16 %v450
        %v547 = vunpack.c.l.b16 %v451
        %v548 = vunpack.c.l.b16 %v452
        %v549 = vunpack.c.l.b16 %v453
        %v550 = vunpack.c.l.b16 %v454
        %v551 = vunpack.c.l.b16 %v455
        %v552 = vunpack.c.l.b16 %v456
        %v553 = vunpack.c.l.b16 %v457
        %v554 = vunpack.c.l.b16 %v458
        %v555 = vunpack.c.l.b16 %v459
        %v556 = vunpack.c.l.b16 %v460
        %v557 = vunpack.c.l.b16 %v461
        %v558 = vunpack.c.l.b16 %v462
        %v559 = vunpack.c.l.b16 %v463
        %v560 = vunpack.c.l.b16 %v464
        %v561 = vunpack.c.l.b16 %v465
        %v562 = vunpack.c.l.b16 %v466
        %v563 = vunpack.c.l.b16 %v467
        %v564 = vunpack.c.l.b16 %v468
        %v565 = vunpack.c.l.b16 %v469
        %v566 = vunpack.c.l.b16 %v470
        %v567 = vunpack.c.l.b16 %v471
        %v568 = vunpack.c.l.b16 %v472
        %v569 = vunpack.c.l.b16 %v473
        %v570 = vunpack.c.l.b16 %v474
        %v571 = vunpack.c.l.b16 %v475
        %v572 = vunpack.c.l.b16 %v476
        %v573 = vunpack.c.l.b16 %v477
        %v574 = vunpack.c.l.b16 %v478
        %v575 = vunpack.c.l.b16 %v479
        %v576 = vpack.c.b16 %v545, %v544
        %v577 = vpack.c.b16 %v547, %v546
        %v578 = vpack.c.b16 %v549, %v548
        %v579 = vpack.c.b16 %v551, %v550
        %v580 = vpack.c.b16 %v553, %v552
        %v581 = vpack.c.b16 %v555, %v554
        %v582 = vpack.c.b16 %v557, %v556
        %v583 = vpack.c.b16 %v559, %v558
        %v584 = vpack.c.b16 %v561, %v560
        %v585 = vpack.c.b16 %v563, %v562
        %v586 = vpack.c.b16 %v565, %v564
        %v587 = vpack.c.b16 %v567, %v566
        %v588 = vpack.c.b16 %v569, %v568
        %v589 = vpack.c.b16 %v571, %v570
        %v590 = vpack.c.b16 %v573, %v572
        %v591 = vpack.c.b16 %v575, %v574
        %v640 = vunpack.c.l.b16 %v480
        %v641 = vunpack.c.h.b16 %v480
        %v642 = vunpack.c.l.b16 %v481
        %v643 = vunpack.c.l.b16 %v482
        %v644 = vunpack.c.h.b16 %v482
        %v645 = vunpack.c.l.b16 %v483
        %v646 = vunpack.c.l.b16 %v484
        %v647 = vunpack.c.h.b16 %v484
        %v648 = vunpack.c.l.b16 %v485
        %v649 = vunpack.c.l.b16 %v486
        %v650 = vunpack.c.h.b16 %v486
        %v651 = vunpack.c.l.b16 %v487
        %v652 = vunpack.c.l.b16 %v488
        %v653 = vunpack.c.h.b16 %v488
        %v654 = vunpack.c.l.b16 %v489
        %v655 = vunpack.c.l.b16 %v490
        %v656 = vunpack.c.h.b16 %v490
        %v657 = vunpack.c.l.b16 %v491
        %v658 = vunpack.c.l.b16 %v492
        %v659 = vunpack.c.h.b16 %v492
        %v660 = vunpack.c.l.b16 %v493
        %v661 = vunpack.c.l.b16 %v494
        %v662 = vunpack.c.h.b16 %v494
        %v663 = vunpack.c.l.b16 %v495
        %v664 = vunpack.c.l.b16 %v496
        %v665 = vunpack.c.h.b16 %v496
        %v666 = vunpack.c.l.b16 %v497
        %v667 = vunpack.c.l.b16 %v498
        %v668 = vunpack.c.h.b16 %v498
        %v669 = vunpack.c.l.b16 %v499
        %v670 = vunpack.c.l.b16 %v500
        %v671 = vunpack.c.h.b16 %v500
        %v672 = vunpack.c.l.b16 %v501
        %v673 = vunpack.c.l.b16 %v502
        %v674 = vunpack.c.h.b16 %v502
        %v675 = vunpack.c.l.b16 %v503
        %v676 = vunpack.c.l.b16 %v504
        %v677 = vunpack.c.h.b16 %v504
        %v678 = vunpack.c.l.b16 %v505
        %v679 = vunpack.c.l.b16 %v506
        %v680 = vunpack.c.h.b16 %v506
        %v681 = vunpack.c.l.b16 %v507
        %v682 = vunpack.c.l.b16 %v508
        %v683 = vunpack.c.h.b16 %v508
        %v684 = vunpack.c.l.b16 %v509
        %v685 = vunpack.c.l.b16 %v510
        %v686 = vunpack.c.h.b16 %v510
        %v687 = vunpack.c.l.b16 %v511
        %v688 = vpack.c.b16 %v643, %v640
        %v689 = vpack.c.b16 %v644, %v641
        %v690 = vpack.c.b16 %v645, %v642
        %v691 = vpack.c.b16 %v649, %v646
        %v692 = vpack.c.b16 %v650, %v647
        %v693 = vpack.c.b16 %v651, %v648
        %v694 = vpack.c.b16 %v655, %v652
        %v695 = vpack.c.b16 %v656, %v653
        %v696 = vpack.c.b16 %v657, %v654
        %v697 = vpack.c.b16 %v661, %v658
        %v698 = vpack.c.b16 %v662, %v659
        %v699 = vpack.c.b16 %v663, %v660
        %v700 = vpack.c.b16 %v667, %v664
        %v701 = vpack.c.b16 %v668, %v665
        %v702 = vpack.c.b16 %v669, %v666
        %v703 = vpack.c.b16 %v673, %v670
        %v704 = vpack.c.b16 %v674, %v671
        %v705 = vpack.c.b16 %v675, %v672
        %v706 = vpack.c.b16 %v679, %v676
        %v707 = vpack.c.b16 %v680, %v677
        %v708 = vpack.c.b16 %v681, %v678
        %v709 = vpack.c.b16 %v685, %v682
        %v710 = vpack.c.b16 %v686, %v683
        %v711 = vpack.c.b16 %v687, %v684
        %736 = vmatprep.subr.bf16.mxu0 %v689
        %737 = vmatpush1.bf16.msra.mxu0 %v688
        %738 = vmatprep.subr.bf16.mxu0 %v692
        %739 = vmatpush1.bf16.msra.mxu0 %v691
        %740 = vmatprep.subr.bf16.mxu0 %v695
        %741 = vmatpush1.bf16.msra.mxu0 %v694
        %742 = vmatprep.subr.bf16.mxu0 %v698
        %743 = vmatpush1.bf16.msra.mxu0 %v697
        %744 = vmatprep.subr.bf16.mxu0 %v701
        %745 = vmatpush1.bf16.msra.mxu0 %v700
        %746 = vmatprep.subr.bf16.mxu0 %v704
        %747 = vmatpush1.bf16.msra.mxu0 %v703
        %748 = vmatprep.subr.bf16.mxu0 %v707
        %749 = vmatpush1.bf16.msra.mxu0 %v706
        %750 = vmatprep.subr.bf16.mxu0 %v710
        %751 = vmatpush1.bf16.msra.mxu0 %v709
        %752 = vmatprep.subr.bf16.mxu0 0
        %753 = vmatpush1.bf16.msra.mxu0 0
        %754 = vmatprep.subr.bf16.mxu0 0
        %755 = vmatpush1.bf16.msra.mxu0 0
        %756 = vmatprep.subr.bf16.mxu0 0
        %757 = vmatpush1.bf16.msra.mxu0 0
        %758 = vmatprep.subr.bf16.mxu0 0
        %759 = vmatpush1.bf16.msra.mxu0 0
        %760 = vmatprep.subr.bf16.mxu0 0
        %761 = vmatpush1.bf16.msra.mxu0 0
        %762 = vmatprep.subr.bf16.mxu0 0
        %763 = vmatpush1.bf16.msra.mxu0 0
        %764 = vmatprep.subr.bf16.mxu0 0
        %765 = vmatpush1.bf16.msra.mxu0 0
        %766 = vmatprep.subr.bf16.mxu0 0
        %767 = vmatpush1.bf16.msra.mxu0 0
        %768 = vmatprep.mubr.bf16.mxu0 0
        %769 = vmatmul.mubr.bf16.gmra.mrb[0].mxu0 %v576
        %v770 = vpop.f32.mrb[0].mxu0
        %v771 = vadd.f32 0.0, %v770
        %v772 = vpop.f32.mrb[0].mxu0
        %v773 = vadd.f32 0.0, %v772
        %v774 = vpop.f32.mrb[0].mxu0
        %v775 = vadd.f32 0.0, %v774
        %v776 = vpop.f32.mrb[0].mxu0
        %v777 = vadd.f32 0.0, %v776
        %778 = vmatprep.mubr.bf16.mxu0 0
        %779 = vmatmul.mubr.bf16.gmra.mrb[0].mxu0 %v577
        %v780 = vpop.f32.mrb[0].mxu0
        %v781 = vadd.f32 0.0, %v780
        %v782 = vpop.f32.mrb[0].mxu0
        %v783 = vadd.f32 0.0, %v782
        %v784 = vpop.f32.mrb[0].mxu0
        %v785 = vadd.f32 0.0, %v784
        %v786 = vpop.f32.mrb[0].mxu0
        %v787 = vadd.f32 0.0, %v786
        %788 = vmatprep.mubr.bf16.mxu0 0
        %789 = vmatmul.mubr.bf16.gmra.mrb[0].mxu0 %v578
        %v790 = vpop.f32.mrb[0].mxu0
        %v791 = vadd.f32 0.0, %v790
        %v792 = vpop.f32.mrb[0].mxu0
        %v793 = vadd.f32 0.0, %v792
        %v794 = vpop.f32.mrb[0].mxu0
        %v795 = vadd.f32 0.0, %v794
        %v796 = vpop.f32.mrb[0].mxu0
        %v797 = vadd.f32 0.0, %v796
        %798 = vmatprep.mubr.bf16.mxu0 0
        %799 = vmatmul.mubr.bf16.gmra.mrb[0].mxu0 %v579
        %v800 = vpop.f32.mrb[0].mxu0
        %v801 = vadd.f32 0.0, %v800
        %v802 = vpop.f32.mrb[0].mxu0
        %v803 = vadd.f32 0.0, %v802
        %v804 = vpop.f32.mrb[0].mxu0
        %v805 = vadd.f32 0.0, %v804
        %v806 = vpop.f32.mrb[0].mxu0
        %v807 = vadd.f32 0.0, %v806
        %808 = vmatprep.mubr.bf16.mxu0 0
        %809 = vmatmul.mubr.bf16.gmra.mrb[0].mxu0 %v580
        %v810 = vpop.f32.mrb[0].mxu0
        %v811 = vadd.f32 0.0, %v810
        %v812 = vpop.f32.mrb[0].mxu0
        %v813 = vadd.f32 0.0, %v812
        %v814 = vpop.f32.mrb[0].mxu0
        %v815 = vadd.f32 0.0, %v814
        %v816 = vpop.f32.mrb[0].mxu0
        %v817 = vadd.f32 0.0, %v816
        %818 = vmatprep.mubr.bf16.mxu0 0
        %819 = vmatmul.mubr.bf16.gmra.mrb[0].mxu0 %v581
        %v820 = vpop.f32.mrb[0].mxu0
        %v821 = vadd.f32 0.0, %v820
        %v822 = vpop.f32.mrb[0].mxu0
        %v823 = vadd.f32 0.0, %v822
        %v824 = vpop.f32.mrb[0].mxu0
        %v825 = vadd.f32 0.0, %v824
        %v826 = vpop.f32.mrb[0].mxu0
        %v827 = vadd.f32 0.0, %v826
        %828 = vmatprep.mubr.bf16.mxu0 0
        %829 = vmatmul.mubr.bf16.gmra.mrb[0].mxu0 %v582
        %v830 = vpop.f32.mrb[0].mxu0
        %v831 = vadd.f32 0.0, %v830
        %v832 = vpop.f32.mrb[0].mxu0
        %v833 = vadd.f32 0.0, %v832
        %v834 = vpop.f32.mrb[0].mxu0
        %v835 = vadd.f32 0.0, %v834
        %v836 = vpop.f32.mrb[0].mxu0
        %v837 = vadd.f32 0.0, %v836
        %838 = vmatprep.mubr.bf16.mxu0 0
        %839 = vmatmul.mubr.bf16.gmra.mrb[0].mxu0 %v583
        %v840 = vpop.f32.mrb[0].mxu0
        %v841 = vadd.f32 0.0, %v840
        %v842 = vpop.f32.mrb[0].mxu0
        %v843 = vadd.f32 0.0, %v842
        %v844 = vpop.f32.mrb[0].mxu0
        %v845 = vadd.f32 0.0, %v844
        %v846 = vpop.f32.mrb[0].mxu0
        %v847 = vadd.f32 0.0, %v846
        %848 = vmatprep.mubr.bf16.mxu0 0
        %849 = vmatmul.mubr.bf16.gmra.mrb[0].mxu0 %v584
        %v850 = vpop.f32.mrb[0].mxu0
        %v851 = vadd.f32 0.0, %v850
        %v852 = vpop.f32.mrb[0].mxu0
        %v853 = vadd.f32 0.0, %v852
        %v854 = vpop.f32.mrb[0].mxu0
        %v855 = vadd.f32 0.0, %v854
        %v856 = vpop.f32.mrb[0].mxu0
        %v857 = vadd.f32 0.0, %v856
        %858 = vmatprep.mubr.bf16.mxu0 0
        %859 = vmatmul.mubr.bf16.gmra.mrb[0].mxu0 %v585
        %v860 = vpop.f32.mrb[0].mxu0
        %v861 = vadd.f32 0.0, %v860
        %v862 = vpop.f32.mrb[0].mxu0
        %v863 = vadd.f32 0.0, %v862
        %v864 = vpop.f32.mrb[0].mxu0
        %v865 = vadd.f32 0.0, %v864
        %v866 = vpop.f32.mrb[0].mxu0
        %v867 = vadd.f32 0.0, %v866
        %868 = vmatprep.mubr.bf16.mxu0 0
        %869 = vmatmul.mubr.bf16.gmra.mrb[0].mxu0 %v586
        %v870 = vpop.f32.mrb[0].mxu0
        %v871 = vadd.f32 0.0, %v870
        %v872 = vpop.f32.mrb[0].mxu0
        %v873 = vadd.f32 0.0, %v872
        %v874 = vpop.f32.mrb[0].mxu0
        %v875 = vadd.f32 0.0, %v874
        %v876 = vpop.f32.mrb[0].mxu0
        %v877 = vadd.f32 0.0, %v876
        %878 = vmatprep.mubr.bf16.mxu0 0
        %879 = vmatmul.mubr.bf16.gmra.mrb[0].mxu0 %v587
        %v880 = vpop.f32.mrb[0].mxu0
        %v881 = vadd.f32 0.0, %v880
        %v882 = vpop.f32.mrb[0].mxu0
        %v883 = vadd.f32 0.0, %v882
        %v884 = vpop.f32.mrb[0].mxu0
        %v885 = vadd.f32 0.0, %v884
        %v886 = vpop.f32.mrb[0].mxu0
        %v887 = vadd.f32 0.0, %v886
        %888 = vmatprep.mubr.bf16.mxu0 0
        %889 = vmatmul.mubr.bf16.gmra.mrb[0].mxu0 %v588
        %v890 = vpop.f32.mrb[0].mxu0
        %v891 = vadd.f32 0.0, %v890
        %v892 = vpop.f32.mrb[0].mxu0
        %v893 = vadd.f32 0.0, %v892
        %v894 = vpop.f32.mrb[0].mxu0
        %v895 = vadd.f32 0.0, %v894
        %v896 = vpop.f32.mrb[0].mxu0
        %v897 = vadd.f32 0.0, %v896
        %898 = vmatprep.mubr.bf16.mxu0 0
        %899 = vmatmul.mubr.bf16.gmra.mrb[0].mxu0 %v589
        %v900 = vpop.f32.mrb[0].mxu0
        %v901 = vadd.f32 0.0, %v900
        %v902 = vpop.f32.mrb[0].mxu0
        %v903 = vadd.f32 0.0, %v902
        %v904 = vpop.f32.mrb[0].mxu0
        %v905 = vadd.f32 0.0, %v904
        %v906 = vpop.f32.mrb[0].mxu0
        %v907 = vadd.f32 0.0, %v906
        %908 = vmatprep.mubr.bf16.mxu0 0
        %909 = vmatmul.mubr.bf16.gmra.mrb[0].mxu0 %v590
        %v910 = vpop.f32.mrb[0].mxu0
        %v911 = vadd.f32 0.0, %v910
        %v912 = vpop.f32.mrb[0].mxu0
        %v913 = vadd.f32 0.0, %v912
        %v914 = vpop.f32.mrb[0].mxu0
        %v915 = vadd.f32 0.0, %v914
        %v916 = vpop.f32.mrb[0].mxu0
        %v917 = vadd.f32 0.0, %v916
        %918 = vmatprep.mubr.bf16.mxu0 0
        %919 = vmatmul.mubr.bf16.gmra.mrb[0].mxu0 %v591
        %v920 = vpop.f32.mrb[0].mxu0
        %v921 = vadd.f32 0.0, %v920
        %v922 = vpop.f32.mrb[0].mxu0
        %v923 = vadd.f32 0.0, %v922
        %v924 = vpop.f32.mrb[0].mxu0
        %v925 = vadd.f32 0.0, %v924
        %v926 = vpop.f32.mrb[0].mxu0
        %v927 = vadd.f32 0.0, %v926
        %928 = vdwg.mxu0
        %929 = vmatprep.subr.bf16.mxu0 0
        %930 = vmatpush1.bf16.msra.mxu0 %v690
        %931 = vmatprep.subr.bf16.mxu0 0
        %932 = vmatpush1.bf16.msra.mxu0 %v693
        %933 = vmatprep.subr.bf16.mxu0 0
        %934 = vmatpush1.bf16.msra.mxu0 %v696
        %935 = vmatprep.subr.bf16.mxu0 0
        %936 = vmatpush1.bf16.msra.mxu0 %v699
        %937 = vmatprep.subr.bf16.mxu0 0
        %938 = vmatpush1.bf16.msra.mxu0 %v702
        %939 = vmatprep.subr.bf16.mxu0 0
        %940 = vmatpush1.bf16.msra.mxu0 %v705
        %941 = vmatprep.subr.bf16.mxu0 0
        %942 = vmatpush1.bf16.msra.mxu0 %v708
        %943 = vmatprep.subr.bf16.mxu0 0
        %944 = vmatpush1.bf16.msra.mxu0 %v711
        %945 = vmatprep.subr.bf16.mxu0 0
        %946 = vmatpush1.bf16.msra.mxu0 0
        %947 = vmatprep.subr.bf16.mxu0 0
        %948 = vmatpush1.bf16.msra.mxu0 0
        %949 = vmatprep.subr.bf16.mxu0 0
        %950 = vmatpush1.bf16.msra.mxu0 0
        %951 = vmatprep.subr.bf16.mxu0 0
        %952 = vmatpush1.bf16.msra.mxu0 0
        %953 = vmatprep.subr.bf16.mxu0 0
        %954 = vmatpush1.bf16.msra.mxu0 0
        %955 = vmatprep.subr.bf16.mxu0 0
        %956 = vmatpush1.bf16.msra.mxu0 0
        %957 = vmatprep.subr.bf16.mxu0 0
        %958 = vmatpush1.bf16.msra.mxu0 0
        %959 = vmatprep.subr.bf16.mxu0 0
        %960 = vmatpush1.bf16.msra.mxu0 0
        %961 = vmatprep.mubr.bf16.mxu0 0
        %962 = vmatmul.mubr.bf16.gmra.mrb[0].mxu0 %v576
        %v963 = vpop.f32.mrb[0].mxu0
        %v964 = vadd.f32 0.0, %v963
        %v965 = vpop.f32.mrb[0].mxu0
        %v966 = vpop.f32.mrb[0].mxu0
        %v967 = vadd.f32 0.0, %v966
        %v968 = vpop.f32.mrb[0].mxu0
        %969 = vmatprep.mubr.bf16.mxu0 0
        %970 = vmatmul.mubr.bf16.gmra.mrb[0].mxu0 %v577
        %v971 = vpop.f32.mrb[0].mxu0
        %v972 = vadd.f32 0.0, %v971
        %v973 = vpop.f32.mrb[0].mxu0
        %v974 = vpop.f32.mrb[0].mxu0
        %v975 = vadd.f32 0.0, %v974
        %v976 = vpop.f32.mrb[0].mxu0
        %977 = vmatprep.mubr.bf16.mxu0 0
        %978 = vmatmul.mubr.bf16.gmra.mrb[0].mxu0 %v578
        %v979 = vpop.f32.mrb[0].mxu0
        %v980 = vadd.f32 0.0, %v979
        %v981 = vpop.f32.mrb[0].mxu0
        %v982 = vpop.f32.mrb[0].mxu0
        %v983 = vadd.f32 0.0, %v982
        %v984 = vpop.f32.mrb[0].mxu0
        %985 = vmatprep.mubr.bf16.mxu0 0
        %986 = vmatmul.mubr.bf16.gmra.mrb[0].mxu0 %v579
        %v987 = vpop.f32.mrb[0].mxu0
        %v988 = vadd.f32 0.0, %v987
        %v989 = vpop.f32.mrb[0].mxu0
        %v990 = vpop.f32.mrb[0].mxu0
        %v991 = vadd.f32 0.0, %v990
        %v992 = vpop.f32.mrb[0].mxu0
        %993 = vmatprep.mubr.bf16.mxu0 0
        %994 = vmatmul.mubr.bf16.gmra.mrb[0].mxu0 %v580
        %v995 = vpop.f32.mrb[0].mxu0
        %v996 = vadd.f32 0.0, %v995
        %v997 = vpop.f32.mrb[0].mxu0
        %v998 = vpop.f32.mrb[0].mxu0
        %v999 = vadd.f32 0.0, %v998
        %v1000 = vpop.f32.mrb[0].mxu0
        %1001 = vmatprep.mubr.bf16.mxu0 0
        %1002 = vmatmul.mubr.bf16.gmra.mrb[0].mxu0 %v581
        %v1003 = vpop.f32.mrb[0].mxu0
        %v1004 = vadd.f32 0.0, %v1003
        %v1005 = vpop.f32.mrb[0].mxu0
        %v1006 = vpop.f32.mrb[0].mxu0
        %v1007 = vadd.f32 0.0, %v1006
        %v1008 = vpop.f32.mrb[0].mxu0
        %1009 = vmatprep.mubr.bf16.mxu0 0
        %1010 = vmatmul.mubr.bf16.gmra.mrb[0].mxu0 %v582
        %v1011 = vpop.f32.mrb[0].mxu0
        %v1012 = vadd.f32 0.0, %v1011
        %v1013 = vpop.f32.mrb[0].mxu0
        %v1014 = vpop.f32.mrb[0].mxu0
        %v1015 = vadd.f32 0.0, %v1014
        %v1016 = vpop.f32.mrb[0].mxu0
        %1017 = vmatprep.mubr.bf16.mxu0 0
        %1018 = vmatmul.mubr.bf16.gmra.mrb[0].mxu0 %v583
        %v1019 = vpop.f32.mrb[0].mxu0
        %v1020 = vadd.f32 0.0, %v1019
        %v1021 = vpop.f32.mrb[0].mxu0
        %v1022 = vpop.f32.mrb[0].mxu0
        %v1023 = vadd.f32 0.0, %v1022
        %v1024 = vpop.f32.mrb[0].mxu0
        %1025 = vmatprep.mubr.bf16.mxu0 0
        %1026 = vmatmul.mubr.bf16.gmra.mrb[0].mxu0 %v584
        %v1027 = vpop.f32.mrb[0].mxu0
        %v1028 = vadd.f32 0.0, %v1027
        %v1029 = vpop.f32.mrb[0].mxu0
        %v1030 = vpop.f32.mrb[0].mxu0
        %v1031 = vadd.f32 0.0, %v1030
        %v1032 = vpop.f32.mrb[0].mxu0
        %1033 = vmatprep.mubr.bf16.mxu0 0
        %1034 = vmatmul.mubr.bf16.gmra.mrb[0].mxu0 %v585
        %v1035 = vpop.f32.mrb[0].mxu0
        %v1036 = vadd.f32 0.0, %v1035
        %v1037 = vpop.f32.mrb[0].mxu0
        %v1038 = vpop.f32.mrb[0].mxu0
        %v1039 = vadd.f32 0.0, %v1038
        %v1040 = vpop.f32.mrb[0].mxu0
        %1041 = vmatprep.mubr.bf16.mxu0 0
        %1042 = vmatmul.mubr.bf16.gmra.mrb[0].mxu0 %v586
        %v1043 = vpop.f32.mrb[0].mxu0
        %v1044 = vadd.f32 0.0, %v1043
        %v1045 = vpop.f32.mrb[0].mxu0
        %v1046 = vpop.f32.mrb[0].mxu0
        %v1047 = vadd.f32 0.0, %v1046
        %v1048 = vpop.f32.mrb[0].mxu0
        %1049 = vmatprep.mubr.bf16.mxu0 0
        %1050 = vmatmul.mubr.bf16.gmra.mrb[0].mxu0 %v587
        %v1051 = vpop.f32.mrb[0].mxu0
        %v1052 = vadd.f32 0.0, %v1051
        %v1053 = vpop.f32.mrb[0].mxu0
        %v1054 = vpop.f32.mrb[0].mxu0
        %v1055 = vadd.f32 0.0, %v1054
        %v1056 = vpop.f32.mrb[0].mxu0
        %1057 = vmatprep.mubr.bf16.mxu0 0
        %1058 = vmatmul.mubr.bf16.gmra.mrb[0].mxu0 %v588
        %v1059 = vpop.f32.mrb[0].mxu0
        %v1060 = vadd.f32 0.0, %v1059
        %v1061 = vpop.f32.mrb[0].mxu0
        %v1062 = vpop.f32.mrb[0].mxu0
        %v1063 = vadd.f32 0.0, %v1062
        %v1064 = vpop.f32.mrb[0].mxu0
        %1065 = vmatprep.mubr.bf16.mxu0 0
        %1066 = vmatmul.mubr.bf16.gmra.mrb[0].mxu0 %v589
        %v1067 = vpop.f32.mrb[0].mxu0
        %v1068 = vadd.f32 0.0, %v1067
        %v1069 = vpop.f32.mrb[0].mxu0
        %v1070 = vpop.f32.mrb[0].mxu0
        %v1071 = vadd.f32 0.0, %v1070
        %v1072 = vpop.f32.mrb[0].mxu0
        %1073 = vmatprep.mubr.bf16.mxu0 0
        %1074 = vmatmul.mubr.bf16.gmra.mrb[0].mxu0 %v590
        %v1075 = vpop.f32.mrb[0].mxu0
        %v1076 = vadd.f32 0.0, %v1075
        %v1077 = vpop.f32.mrb[0].mxu0
        %v1078 = vpop.f32.mrb[0].mxu0
        %v1079 = vadd.f32 0.0, %v1078
        %v1080 = vpop.f32.mrb[0].mxu0
        %1081 = vmatprep.mubr.bf16.mxu0 0
        %1082 = vmatmul.mubr.bf16.gmra.mrb[0].mxu0 %v591
        %v1083 = vpop.f32.mrb[0].mxu0
        %v1084 = vadd.f32 0.0, %v1083
        %v1085 = vpop.f32.mrb[0].mxu0
        %v1086 = vpop.f32.mrb[0].mxu0
        %v1087 = vadd.f32 0.0, %v1086
        %v1088 = vpop.f32.mrb[0].mxu0
        %1089 = vdwg.mxu0
        %v1090 = vlaneseq
        %v1091 = vshrl.u32 %v1090, 7
        %v1092 = vadd.s32 %v1091, 8
        %v1093 = vadd.s32 %v1091, 16
        %v1094 = vadd.s32 %v1091, 24
        %v1095 = vadd.s32 %v1091, 32
        %v1096 = vadd.s32 %v1091, 40
        %v1097 = vadd.s32 %v1091, 48
        %v1098 = vadd.s32 %v1091, 56
        %v1099 = vadd.s32 %v1091, 64
        %v1100 = vadd.s32 %v1091, 72
        %v1101 = vadd.s32 %v1091, 80
        %v1102 = vadd.s32 %v1091, 88
        %v1103 = vadd.s32 %v1091, 96
        %v1104 = vadd.s32 %v1091, 104
        %v1105 = vadd.s32 %v1091, 112
        %v1106 = vadd.s32 %v1091, 120
        %v1107 = vadd.s32 %v1091, 128
        %v1108 = vadd.s32 %v1091, 136
        %v1109 = vadd.s32 %v1091, 144
        %v1110 = vadd.s32 %v1091, 152
        %v1111 = vadd.s32 %v1091, 160
        %v1112 = vadd.s32 %v1091, 168
        %v1113 = vadd.s32 %v1091, 176
        %v1114 = vadd.s32 %v1091, 184
        %v1115 = vadd.s32 %v1091, 192
        %v1116 = vadd.s32 %v1091, 200
        %v1117 = vadd.s32 %v1091, 208
        %v1118 = vadd.s32 %v1091, 216
        %v1119 = vadd.s32 %v1091, 224
        %v1120 = vadd.s32 %v1091, 232
        %v1121 = vadd.s32 %v1091, 240
        %v1122 = vadd.s32 %v1091, 248
        %vm1123 = vcmp.lt.s32.totalorder %v1091, 16
        %vm1124 = vcmp.lt.s32.totalorder %v1092, 16
        %vm1125 = vcmp.lt.s32.totalorder %v1093, 16
        %vm1126 = vcmp.lt.s32.totalorder %v1094, 16
        %vm1127 = vcmp.lt.s32.totalorder %v1095, 16
        %vm1128 = vcmp.lt.s32.totalorder %v1096, 16
        %vm1129 = vcmp.lt.s32.totalorder %v1097, 16
        %vm1130 = vcmp.lt.s32.totalorder %v1098, 16
        %vm1131 = vcmp.lt.s32.totalorder %v1099, 16
        %vm1132 = vcmp.lt.s32.totalorder %v1100, 16
        %vm1133 = vcmp.lt.s32.totalorder %v1101, 16
        %vm1134 = vcmp.lt.s32.totalorder %v1102, 16
        %vm1135 = vcmp.lt.s32.totalorder %v1103, 16
        %vm1136 = vcmp.lt.s32.totalorder %v1104, 16
        %vm1137 = vcmp.lt.s32.totalorder %v1105, 16
        %vm1138 = vcmp.lt.s32.totalorder %v1106, 16
        %vm1139 = vcmp.lt.s32.totalorder %v1107, 16
        %vm1140 = vcmp.lt.s32.totalorder %v1108, 16
        %vm1141 = vcmp.lt.s32.totalorder %v1109, 16
        %vm1142 = vcmp.lt.s32.totalorder %v1110, 16
        %vm1143 = vcmp.lt.s32.totalorder %v1111, 16
        %vm1144 = vcmp.lt.s32.totalorder %v1112, 16
        %vm1145 = vcmp.lt.s32.totalorder %v1113, 16
        %vm1146 = vcmp.lt.s32.totalorder %v1114, 16
        %vm1147 = vcmp.lt.s32.totalorder %v1115, 16
        %vm1148 = vcmp.lt.s32.totalorder %v1116, 16
        %vm1149 = vcmp.lt.s32.totalorder %v1117, 16
        %vm1150 = vcmp.lt.s32.totalorder %v1118, 16
        %vm1151 = vcmp.lt.s32.totalorder %v1119, 16
        %vm1152 = vcmp.lt.s32.totalorder %v1120, 16
        %vm1153 = vcmp.lt.s32.totalorder %v1121, 16
        %vm1154 = vcmp.lt.s32.totalorder %v1122, 16
        %v1155 = vsel %vm1123, 1, 0
        %v1156 = vsel %vm1124, 1, 0
        %v1157 = vsel %vm1125, 1, 0
        %v1158 = vsel %vm1126, 1, 0
        %v1159 = vsel %vm1127, 1, 0
        %v1160 = vsel %vm1128, 1, 0
        %v1161 = vsel %vm1129, 1, 0
        %v1162 = vsel %vm1130, 1, 0
        %v1163 = vsel %vm1131, 1, 0
        %v1164 = vsel %vm1132, 1, 0
        %v1165 = vsel %vm1133, 1, 0
        %v1166 = vsel %vm1134, 1, 0
        %v1167 = vsel %vm1135, 1, 0
        %v1168 = vsel %vm1136, 1, 0
        %v1169 = vsel %vm1137, 1, 0
        %v1170 = vsel %vm1138, 1, 0
        %v1171 = vsel %vm1139, 1, 0
        %v1172 = vsel %vm1140, 1, 0
        %v1173 = vsel %vm1141, 1, 0
        %v1174 = vsel %vm1142, 1, 0
        %v1175 = vsel %vm1143, 1, 0
        %v1176 = vsel %vm1144, 1, 0
        %v1177 = vsel %vm1145, 1, 0
        %v1178 = vsel %vm1146, 1, 0
        %v1179 = vsel %vm1147, 1, 0
        %v1180 = vsel %vm1148, 1, 0
        %v1181 = vsel %vm1149, 1, 0
        %v1182 = vsel %vm1150, 1, 0
        %v1183 = vsel %vm1151, 1, 0
        %v1184 = vsel %vm1152, 1, 0
        %v1185 = vsel %vm1153, 1, 0
        %v1186 = vsel %vm1154, 1, 0
        %vm1187 = vcmp.eq.s32.totalorder %v1155, 1
        %vm1188 = vcmp.eq.s32.totalorder %v1156, 1
        %vm1189 = vcmp.eq.s32.totalorder %v1157, 1
        %vm1190 = vcmp.eq.s32.totalorder %v1158, 1
        %vm1191 = vcmp.eq.s32.totalorder %v1159, 1
        %vm1192 = vcmp.eq.s32.totalorder %v1160, 1
        %vm1193 = vcmp.eq.s32.totalorder %v1161, 1
        %vm1194 = vcmp.eq.s32.totalorder %v1162, 1
        %vm1195 = vcmp.eq.s32.totalorder %v1163, 1
        %vm1196 = vcmp.eq.s32.totalorder %v1164, 1
        %vm1197 = vcmp.eq.s32.totalorder %v1165, 1
        %vm1198 = vcmp.eq.s32.totalorder %v1166, 1
        %vm1199 = vcmp.eq.s32.totalorder %v1167, 1
        %vm1200 = vcmp.eq.s32.totalorder %v1168, 1
        %vm1201 = vcmp.eq.s32.totalorder %v1169, 1
        %vm1202 = vcmp.eq.s32.totalorder %v1170, 1
        %vm1203 = vcmp.eq.s32.totalorder %v1171, 1
        %vm1204 = vcmp.eq.s32.totalorder %v1172, 1
        %vm1205 = vcmp.eq.s32.totalorder %v1173, 1
        %vm1206 = vcmp.eq.s32.totalorder %v1174, 1
        %vm1207 = vcmp.eq.s32.totalorder %v1175, 1
        %vm1208 = vcmp.eq.s32.totalorder %v1176, 1
        %vm1209 = vcmp.eq.s32.totalorder %v1177, 1
        %vm1210 = vcmp.eq.s32.totalorder %v1178, 1
        %vm1211 = vcmp.eq.s32.totalorder %v1179, 1
        %vm1212 = vcmp.eq.s32.totalorder %v1180, 1
        %vm1213 = vcmp.eq.s32.totalorder %v1181, 1
        %vm1214 = vcmp.eq.s32.totalorder %v1182, 1
        %vm1215 = vcmp.eq.s32.totalorder %v1183, 1
        %vm1216 = vcmp.eq.s32.totalorder %v1184, 1
        %vm1217 = vcmp.eq.s32.totalorder %v1185, 1
        %vm1218 = vcmp.eq.s32.totalorder %v1186, 1
        %v1219 = vsel %vm1187, 0.0, %v921
        %v1220 = vsel %vm1188, 0.0, %v925
        %v1221 = vsel %vm1189, 0.0, %v771
        %v1222 = vsel %vm1190, 0.0, %v775
        %v1223 = vsel %vm1191, 0.0, %v781
        %v1224 = vsel %vm1192, 0.0, %v785
        %v1225 = vsel %vm1193, 0.0, %v791
        %v1226 = vsel %vm1194, 0.0, %v795
        %v1227 = vsel %vm1195, 0.0, %v801
        %v1228 = vsel %vm1196, 0.0, %v805
        %v1229 = vsel %vm1197, 0.0, %v811
        %v1230 = vsel %vm1198, 0.0, %v815
        %v1231 = vsel %vm1199, 0.0, %v821
        %v1232 = vsel %vm1200, 0.0, %v825
        %v1233 = vsel %vm1201, 0.0, %v831
        %v1234 = vsel %vm1202, 0.0, %v835
        %v1235 = vsel %vm1203, 0.0, %v841
        %v1236 = vsel %vm1204, 0.0, %v845
        %v1237 = vsel %vm1205, 0.0, %v851
        %v1238 = vsel %vm1206, 0.0, %v855
        %v1239 = vsel %vm1207, 0.0, %v861
        %v1240 = vsel %vm1208, 0.0, %v865
        %v1241 = vsel %vm1209, 0.0, %v871
        %v1242 = vsel %vm1210, 0.0, %v875
        %v1243 = vsel %vm1211, 0.0, %v881
        %v1244 = vsel %vm1212, 0.0, %v885
        %v1245 = vsel %vm1213, 0.0, %v891
        %v1246 = vsel %vm1214, 0.0, %v895
        %v1247 = vsel %vm1215, 0.0, %v901
        %v1248 = vsel %vm1216, 0.0, %v905
        %v1249 = vsel %vm1217, 0.0, %v911
        %v1250 = vsel %vm1218, 0.0, %v915
        %vm1251 = vcmp.ge.s32.totalorder %v1091, 240
        %vm1252 = vcmp.ge.s32.totalorder %v1092, 240
        %vm1253 = vcmp.ge.s32.totalorder %v1093, 240
        %vm1254 = vcmp.ge.s32.totalorder %v1094, 240
        %vm1255 = vcmp.ge.s32.totalorder %v1095, 240
        %vm1256 = vcmp.ge.s32.totalorder %v1096, 240
        %vm1257 = vcmp.ge.s32.totalorder %v1097, 240
        %vm1258 = vcmp.ge.s32.totalorder %v1098, 240
        %vm1259 = vcmp.ge.s32.totalorder %v1099, 240
        %vm1260 = vcmp.ge.s32.totalorder %v1100, 240
        %vm1261 = vcmp.ge.s32.totalorder %v1101, 240
        %vm1262 = vcmp.ge.s32.totalorder %v1102, 240
        %vm1263 = vcmp.ge.s32.totalorder %v1103, 240
        %vm1264 = vcmp.ge.s32.totalorder %v1104, 240
        %vm1265 = vcmp.ge.s32.totalorder %v1105, 240
        %vm1266 = vcmp.ge.s32.totalorder %v1106, 240
        %vm1267 = vcmp.ge.s32.totalorder %v1107, 240
        %vm1268 = vcmp.ge.s32.totalorder %v1108, 240
        %vm1269 = vcmp.ge.s32.totalorder %v1109, 240
        %vm1270 = vcmp.ge.s32.totalorder %v1110, 240
        %vm1271 = vcmp.ge.s32.totalorder %v1111, 240
        %vm1272 = vcmp.ge.s32.totalorder %v1112, 240
        %vm1273 = vcmp.ge.s32.totalorder %v1113, 240
        %vm1274 = vcmp.ge.s32.totalorder %v1114, 240
        %vm1275 = vcmp.ge.s32.totalorder %v1115, 240
        %vm1276 = vcmp.ge.s32.totalorder %v1116, 240
        %vm1277 = vcmp.ge.s32.totalorder %v1117, 240
        %vm1278 = vcmp.ge.s32.totalorder %v1118, 240
        %vm1279 = vcmp.ge.s32.totalorder %v1119, 240
        %vm1280 = vcmp.ge.s32.totalorder %v1120, 240
        %vm1281 = vcmp.ge.s32.totalorder %v1121, 240
        %vm1282 = vcmp.ge.s32.totalorder %v1122, 240
        %v1283 = vsel %vm1251, 1, 0
        %v1284 = vsel %vm1252, 1, 0
        %v1285 = vsel %vm1253, 1, 0
        %v1286 = vsel %vm1254, 1, 0
        %v1287 = vsel %vm1255, 1, 0
        %v1288 = vsel %vm1256, 1, 0
        %v1289 = vsel %vm1257, 1, 0
        %v1290 = vsel %vm1258, 1, 0
        %v1291 = vsel %vm1259, 1, 0
        %v1292 = vsel %vm1260, 1, 0
        %v1293 = vsel %vm1261, 1, 0
        %v1294 = vsel %vm1262, 1, 0
        %v1295 = vsel %vm1263, 1, 0
        %v1296 = vsel %vm1264, 1, 0
        %v1297 = vsel %vm1265, 1, 0
        %v1298 = vsel %vm1266, 1, 0
        %v1299 = vsel %vm1267, 1, 0
        %v1300 = vsel %vm1268, 1, 0
        %v1301 = vsel %vm1269, 1, 0
        %v1302 = vsel %vm1270, 1, 0
        %v1303 = vsel %vm1271, 1, 0
        %v1304 = vsel %vm1272, 1, 0
        %v1305 = vsel %vm1273, 1, 0
        %v1306 = vsel %vm1274, 1, 0
        %v1307 = vsel %vm1275, 1, 0
        %v1308 = vsel %vm1276, 1, 0
        %v1309 = vsel %vm1277, 1, 0
        %v1310 = vsel %vm1278, 1, 0
        %v1311 = vsel %vm1279, 1, 0
        %v1312 = vsel %vm1280, 1, 0
        %v1313 = vsel %vm1281, 1, 0
        %v1314 = vsel %vm1282, 1, 0
        %vm1315 = vcmp.eq.s32.totalorder %v1283, 1
        %vm1316 = vcmp.eq.s32.totalorder %v1284, 1
        %vm1317 = vcmp.eq.s32.totalorder %v1285, 1
        %vm1318 = vcmp.eq.s32.totalorder %v1286, 1
        %vm1319 = vcmp.eq.s32.totalorder %v1287, 1
        %vm1320 = vcmp.eq.s32.totalorder %v1288, 1
        %vm1321 = vcmp.eq.s32.totalorder %v1289, 1
        %vm1322 = vcmp.eq.s32.totalorder %v1290, 1
        %vm1323 = vcmp.eq.s32.totalorder %v1291, 1
        %vm1324 = vcmp.eq.s32.totalorder %v1292, 1
        %vm1325 = vcmp.eq.s32.totalorder %v1293, 1
        %vm1326 = vcmp.eq.s32.totalorder %v1294, 1
        %vm1327 = vcmp.eq.s32.totalorder %v1295, 1
        %vm1328 = vcmp.eq.s32.totalorder %v1296, 1
        %vm1329 = vcmp.eq.s32.totalorder %v1297, 1
        %vm1330 = vcmp.eq.s32.totalorder %v1298, 1
        %vm1331 = vcmp.eq.s32.totalorder %v1299, 1
        %vm1332 = vcmp.eq.s32.totalorder %v1300, 1
        %vm1333 = vcmp.eq.s32.totalorder %v1301, 1
        %vm1334 = vcmp.eq.s32.totalorder %v1302, 1
        %vm1335 = vcmp.eq.s32.totalorder %v1303, 1
        %vm1336 = vcmp.eq.s32.totalorder %v1304, 1
        %vm1337 = vcmp.eq.s32.totalorder %v1305, 1
        %vm1338 = vcmp.eq.s32.totalorder %v1306, 1
        %vm1339 = vcmp.eq.s32.totalorder %v1307, 1
        %vm1340 = vcmp.eq.s32.totalorder %v1308, 1
        %vm1341 = vcmp.eq.s32.totalorder %v1309, 1
        %vm1342 = vcmp.eq.s32.totalorder %v1310, 1
        %vm1343 = vcmp.eq.s32.totalorder %v1311, 1
        %vm1344 = vcmp.eq.s32.totalorder %v1312, 1
        %vm1345 = vcmp.eq.s32.totalorder %v1313, 1
        %vm1346 = vcmp.eq.s32.totalorder %v1314, 1
        %v1347 = vsel %vm1315, 0.0, %v972
        %v1348 = vsel %vm1316, 0.0, %v975
        %v1349 = vsel %vm1317, 0.0, %v980
        %v1350 = vsel %vm1318, 0.0, %v983
        %v1351 = vsel %vm1319, 0.0, %v988
        %v1352 = vsel %vm1320, 0.0, %v991
        %v1353 = vsel %vm1321, 0.0, %v996
        %v1354 = vsel %vm1322, 0.0, %v999
        %v1355 = vsel %vm1323, 0.0, %v1004
        %v1356 = vsel %vm1324, 0.0, %v1007
        %v1357 = vsel %vm1325, 0.0, %v1012
        %v1358 = vsel %vm1326, 0.0, %v1015
        %v1359 = vsel %vm1327, 0.0, %v1020
        %v1360 = vsel %vm1328, 0.0, %v1023
        %v1361 = vsel %vm1329, 0.0, %v1028
        %v1362 = vsel %vm1330, 0.0, %v1031
        %v1363 = vsel %vm1331, 0.0, %v1036
        %v1364 = vsel %vm1332, 0.0, %v1039
        %v1365 = vsel %vm1333, 0.0, %v1044
        %v1366 = vsel %vm1334, 0.0, %v1047
        %v1367 = vsel %vm1335, 0.0, %v1052
        %v1368 = vsel %vm1336, 0.0, %v1055
        %v1369 = vsel %vm1337, 0.0, %v1060
        %v1370 = vsel %vm1338, 0.0, %v1063
        %v1371 = vsel %vm1339, 0.0, %v1068
        %v1372 = vsel %vm1340, 0.0, %v1071
        %v1373 = vsel %vm1341, 0.0, %v1076
        %v1374 = vsel %vm1342, 0.0, %v1079
        %v1375 = vsel %vm1343, 0.0, %v1084
        %v1376 = vsel %vm1344, 0.0, %v1087
        %v1377 = vsel %vm1345, 0.0, %v964
        %v1378 = vsel %vm1346, 0.0, %v967
        %v1379 = vadd.f32 %v773, %v1219
        %v1380 = vadd.f32 %v777, %v1220
        %v1381 = vadd.f32 %v783, %v1221
        %v1382 = vadd.f32 %v787, %v1222
        %v1383 = vadd.f32 %v793, %v1223
        %v1384 = vadd.f32 %v797, %v1224
        %v1385 = vadd.f32 %v803, %v1225
        %v1386 = vadd.f32 %v807, %v1226
        %v1387 = vadd.f32 %v813, %v1227
        %v1388 = vadd.f32 %v817, %v1228
        %v1389 = vadd.f32 %v823, %v1229
        %v1390 = vadd.f32 %v827, %v1230
        %v1391 = vadd.f32 %v833, %v1231
        %v1392 = vadd.f32 %v837, %v1232
        %v1393 = vadd.f32 %v843, %v1233
        %v1394 = vadd.f32 %v847, %v1234
        %v1395 = vadd.f32 %v853, %v1235
        %v1396 = vadd.f32 %v857, %v1236
        %v1397 = vadd.f32 %v863, %v1237
        %v1398 = vadd.f32 %v867, %v1238
        %v1399 = vadd.f32 %v873, %v1239
        %v1400 = vadd.f32 %v877, %v1240
        %v1401 = vadd.f32 %v883, %v1241
        %v1402 = vadd.f32 %v887, %v1242
        %v1403 = vadd.f32 %v893, %v1243
        %v1404 = vadd.f32 %v897, %v1244
        %v1405 = vadd.f32 %v903, %v1245
        %v1406 = vadd.f32 %v907, %v1246
        %v1407 = vadd.f32 %v913, %v1247
        %v1408 = vadd.f32 %v917, %v1248
        %v1409 = vadd.f32 %v923, %v1249
        %v1410 = vadd.f32 %v927, %v1250
        %v1411 = vadd.f32 %v1379, %v1347
        %v1412 = vadd.f32 %v1380, %v1348
        %v1413 = vadd.f32 %v1381, %v1349
        %v1414 = vadd.f32 %v1382, %v1350
        %v1415 = vadd.f32 %v1383, %v1351
        %v1416 = vadd.f32 %v1384, %v1352
        %v1417 = vadd.f32 %v1385, %v1353
        %v1418 = vadd.f32 %v1386, %v1354
        %v1419 = vadd.f32 %v1387, %v1355
        %v1420 = vadd.f32 %v1388, %v1356
        %v1421 = vadd.f32 %v1389, %v1357
        %v1422 = vadd.f32 %v1390, %v1358
        %v1423 = vadd.f32 %v1391, %v1359
        %v1424 = vadd.f32 %v1392, %v1360
        %v1425 = vadd.f32 %v1393, %v1361
        %v1426 = vadd.f32 %v1394, %v1362
        %v1427 = vadd.f32 %v1395, %v1363
        %v1428 = vadd.f32 %v1396, %v1364
        %v1429 = vadd.f32 %v1397, %v1365
        %v1430 = vadd.f32 %v1398, %v1366
        %v1431 = vadd.f32 %v1399, %v1367
        %v1432 = vadd.f32 %v1400, %v1368
        %v1433 = vadd.f32 %v1401, %v1369
        %v1434 = vadd.f32 %v1402, %v1370
        %v1435 = vadd.f32 %v1403, %v1371
        %v1436 = vadd.f32 %v1404, %v1372
        %v1437 = vadd.f32 %v1405, %v1373
        %v1438 = vadd.f32 %v1406, %v1374
        %v1439 = vadd.f32 %v1407, %v1375
        %v1440 = vadd.f32 %v1408, %v1376
        %v1441 = vadd.f32 %v1409, %v1377
        %v1442 = vadd.f32 %v1410, %v1378
        %v1443 = vld [vmem:[%s2] sm:$0x1]
        %v1445 = vlaneseq
        %v1446 = vshrl.u32 %v1445, 7
        %v1447 = vsub.s32 0, %v1446
        %v1448 = vrot.slane %v1443, %v1447
        %v1450 = vadd.f32 %v1411, %v1448
        %v1451 = vadd.f32 %v1412, %v1448
        %v1452 = vadd.f32 %v1413, %v1448
        %v1453 = vadd.f32 %v1414, %v1448
        %v1454 = vadd.f32 %v1415, %v1448
        %v1455 = vadd.f32 %v1416, %v1448
        %v1456 = vadd.f32 %v1417, %v1448
        %v1457 = vadd.f32 %v1418, %v1448
        %v1458 = vadd.f32 %v1419, %v1448
        %v1459 = vadd.f32 %v1420, %v1448
        %v1460 = vadd.f32 %v1421, %v1448
        %v1461 = vadd.f32 %v1422, %v1448
        %v1462 = vadd.f32 %v1423, %v1448
        %v1463 = vadd.f32 %v1424, %v1448
        %v1464 = vadd.f32 %v1425, %v1448
        %v1465 = vadd.f32 %v1426, %v1448
        %v1466 = vadd.f32 %v1427, %v1448
        %v1467 = vadd.f32 %v1428, %v1448
        %v1468 = vadd.f32 %v1429, %v1448
        %v1469 = vadd.f32 %v1430, %v1448
        %v1470 = vadd.f32 %v1431, %v1448
        %v1471 = vadd.f32 %v1432, %v1448
        %v1472 = vadd.f32 %v1433, %v1448
        %v1473 = vadd.f32 %v1434, %v1448
        %v1474 = vadd.f32 %v1435, %v1448
        %v1475 = vadd.f32 %v1436, %v1448
        %v1476 = vadd.f32 %v1437, %v1448
        %v1477 = vadd.f32 %v1438, %v1448
        %v1478 = vadd.f32 %v1439, %v1448
        %v1479 = vadd.f32 %v1440, %v1448
        %v1480 = vadd.f32 %v1441, %v1448
        %v1481 = vadd.f32 %v1442, %v1448
        %v1482 = vmax.f32 %v1450, 0.0
        %v1483 = vmax.f32 %v1451, 0.0
        %v1484 = vmax.f32 %v1452, 0.0
        %v1485 = vmax.f32 %v1453, 0.0
        %v1486 = vmax.f32 %v1454, 0.0
        %v1487 = vmax.f32 %v1455, 0.0
        %v1488 = vmax.f32 %v1456, 0.0
        %v1489 = vmax.f32 %v1457, 0.0
        %v1490 = vmax.f32 %v1458, 0.0
        %v1491 = vmax.f32 %v1459, 0.0
        %v1492 = vmax.f32 %v1460, 0.0
        %v1493 = vmax.f32 %v1461, 0.0
        %v1494 = vmax.f32 %v1462, 0.0
        %v1495 = vmax.f32 %v1463, 0.0
        %v1496 = vmax.f32 %v1464, 0.0
        %v1497 = vmax.f32 %v1465, 0.0
        %v1498 = vmax.f32 %v1466, 0.0
        %v1499 = vmax.f32 %v1467, 0.0
        %v1500 = vmax.f32 %v1468, 0.0
        %v1501 = vmax.f32 %v1469, 0.0
        %v1502 = vmax.f32 %v1470, 0.0
        %v1503 = vmax.f32 %v1471, 0.0
        %v1504 = vmax.f32 %v1472, 0.0
        %v1505 = vmax.f32 %v1473, 0.0
        %v1506 = vmax.f32 %v1474, 0.0
        %v1507 = vmax.f32 %v1475, 0.0
        %v1508 = vmax.f32 %v1476, 0.0
        %v1509 = vmax.f32 %v1477, 0.0
        %v1510 = vmax.f32 %v1478, 0.0
        %v1511 = vmax.f32 %v1479, 0.0
        %v1512 = vmax.f32 %v1480, 0.0
        %v1513 = vmax.f32 %v1481, 0.0
        %v1514 = vmax.f32 %v1482, %v1484
        %v1515 = vmax.f32 %v1483, %v1485
        %v1516 = vmax.f32 %v1486, %v1488
        %v1517 = vmax.f32 %v1487, %v1489
        %v1518 = vmax.f32 %v1490, %v1492
        %v1519 = vmax.f32 %v1491, %v1493
        %v1520 = vmax.f32 %v1494, %v1496
        %v1521 = vmax.f32 %v1495, %v1497
        %v1522 = vmax.f32 %v1498, %v1500
        %v1523 = vmax.f32 %v1499, %v1501
        %v1524 = vmax.f32 %v1502, %v1504
        %v1525 = vmax.f32 %v1503, %v1505
        %v1526 = vmax.f32 %v1506, %v1508
        %v1527 = vmax.f32 %v1507, %v1509
        %v1528 = vmax.f32 %v1510, %v1512
        %v1529 = vmax.f32 %v1511, %v1513
        %v1530 = vpack.c.bf16 %v1515, %v1514
        %v1531 = vpack.c.bf16 %v1517, %v1516
        %v1532 = vpack.c.bf16 %v1519, %v1518
        %v1533 = vpack.c.bf16 %v1521, %v1520
        %v1534 = vpack.c.bf16 %v1523, %v1522
        %v1535 = vpack.c.bf16 %v1525, %v1524
        %v1536 = vpack.c.bf16 %v1527, %v1526
        %v1537 = vpack.c.bf16 %v1529, %v1528
        %v1538 = vld [vmem:[%s3] sm:$0xff]
        %v1539 = vld [vmem:[%s3 + $0x8] sm:$0xf]
        %v1540 = vld [vmem:[%s3 + $0xc] sm:$0xff]
        %v1541 = vld [vmem:[%s3 + $0x14] sm:$0xf]
        %v1542 = vld [vmem:[%s3 + $0x18] sm:$0xff]
        %v1543 = vld [vmem:[%s3 + $0x20] sm:$0xf]
        %v1544 = vld [vmem:[%s3 + $0x24] sm:$0xff]
        %v1545 = vld [vmem:[%s3 + $0x2c] sm:$0xf]
        %v1546 = vld [vmem:[%s3 + $0x30] sm:$0xff]
        %v1547 = vld [vmem:[%s3 + $0x38] sm:$0xf]
        %v1548 = vld [vmem:[%s3 + $0x3c] sm:$0xff]
        %v1549 = vld [vmem:[%s3 + $0x44] sm:$0xf]
        %v1550 = vld [vmem:[%s3 + $0x48] sm:$0xff]
        %v1551 = vld [vmem:[%s3 + $0x50] sm:$0xf]
        %v1552 = vld [vmem:[%s3 + $0x54] sm:$0xff]
        %v1553 = vld [vmem:[%s3 + $0x5c] sm:$0xf]
        %v1554 = vld [vmem:[%s3 + $0x60] sm:$0xff]
        %v1555 = vld [vmem:[%s3 + $0x68] sm:$0xf]
        %v1556 = vld [vmem:[%s3 + $0x6c] sm:$0xff]
        %v1557 = vld [vmem:[%s3 + $0x74] sm:$0xf]
        %v1558 = vld [vmem:[%s3 + $0x78] sm:$0xff]
        %v1559 = vld [vmem:[%s3 + $0x80] sm:$0xf]
        %v1560 = vld [vmem:[%s3 + $0x84] sm:$0xff]
        %v1561 = vld [vmem:[%s3 + $0x8c] sm:$0xf]
        %v1562 = vld [vmem:[%s3 + $0x90] sm:$0xff]
        %v1563 = vld [vmem:[%s3 + $0x98] sm:$0xf]
        %v1564 = vld [vmem:[%s3 + $0x9c] sm:$0xff]
        %v1565 = vld [vmem:[%s3 + $0xa4] sm:$0xf]
        %v1566 = vld [vmem:[%s3 + $0xa8] sm:$0xff]
        %v1567 = vld [vmem:[%s3 + $0xb0] sm:$0xf]
        %v1568 = vld [vmem:[%s3 + $0xb4] sm:$0xff]
        %v1569 = vld [vmem:[%s3 + $0xbc] sm:$0xf]
        %v1602 = vunpack.c.l.b16 %v1538
        %v1603 = vunpack.c.h.b16 %v1538
        %v1604 = vunpack.c.l.b16 %v1539
        %v1605 = vunpack.c.l.b16 %v1540
        %v1606 = vunpack.c.h.b16 %v1540
        %v1607 = vunpack.c.l.b16 %v1541
        %v1608 = vunpack.c.l.b16 %v1542
        %v1609 = vunpack.c.h.b16 %v1542
        %v1610 = vunpack.c.l.b16 %v1543
        %v1611 = vunpack.c.l.b16 %v1544
        %v1612 = vunpack.c.h.b16 %v1544
        %v1613 = vunpack.c.l.b16 %v1545
        %v1614 = vunpack.c.l.b16 %v1546
        %v1615 = vunpack.c.h.b16 %v1546
        %v1616 = vunpack.c.l.b16 %v1547
        %v1617 = vunpack.c.l.b16 %v1548
        %v1618 = vunpack.c.h.b16 %v1548
        %v1619 = vunpack.c.l.b16 %v1549
        %v1620 = vunpack.c.l.b16 %v1550
        %v1621 = vunpack.c.h.b16 %v1550
        %v1622 = vunpack.c.l.b16 %v1551
        %v1623 = vunpack.c.l.b16 %v1552
        %v1624 = vunpack.c.h.b16 %v1552
        %v1625 = vunpack.c.l.b16 %v1553
        %v1626 = vunpack.c.l.b16 %v1554
        %v1627 = vunpack.c.h.b16 %v1554
        %v1628 = vunpack.c.l.b16 %v1555
        %v1629 = vunpack.c.l.b16 %v1556
        %v1630 = vunpack.c.h.b16 %v1556
        %v1631 = vunpack.c.l.b16 %v1557
        %v1632 = vunpack.c.l.b16 %v1558
        %v1633 = vunpack.c.h.b16 %v1558
        %v1634 = vunpack.c.l.b16 %v1559
        %v1635 = vunpack.c.l.b16 %v1560
        %v1636 = vunpack.c.h.b16 %v1560
        %v1637 = vunpack.c.l.b16 %v1561
        %v1638 = vunpack.c.l.b16 %v1562
        %v1639 = vunpack.c.h.b16 %v1562
        %v1640 = vunpack.c.l.b16 %v1563
        %v1641 = vunpack.c.l.b16 %v1564
        %v1642 = vunpack.c.h.b16 %v1564
        %v1643 = vunpack.c.l.b16 %v1565
        %v1644 = vunpack.c.l.b16 %v1566
        %v1645 = vunpack.c.h.b16 %v1566
        %v1646 = vunpack.c.l.b16 %v1567
        %v1647 = vunpack.c.l.b16 %v1568
        %v1648 = vunpack.c.h.b16 %v1568
        %v1649 = vunpack.c.l.b16 %v1569
        %v1650 = vpack.c.b16 %v1605, %v1602
        %v1651 = vpack.c.b16 %v1606, %v1603
        %v1652 = vpack.c.b16 %v1607, %v1604
        %v1653 = vpack.c.b16 %v1611, %v1608
        %v1654 = vpack.c.b16 %v1612, %v1609
        %v1655 = vpack.c.b16 %v1613, %v1610
        %v1656 = vpack.c.b16 %v1617, %v1614
        %v1657 = vpack.c.b16 %v1618, %v1615
        %v1658 = vpack.c.b16 %v1619, %v1616
        %v1659 = vpack.c.b16 %v1623, %v1620
        %v1660 = vpack.c.b16 %v1624, %v1621
        %v1661 = vpack.c.b16 %v1625, %v1622
        %v1662 = vpack.c.b16 %v1629, %v1626
        %v1663 = vpack.c.b16 %v1630, %v1627
        %v1664 = vpack.c.b16 %v1631, %v1628
        %v1665 = vpack.c.b16 %v1635, %v1632
        %v1666 = vpack.c.b16 %v1636, %v1633
        %v1667 = vpack.c.b16 %v1637, %v1634
        %v1668 = vpack.c.b16 %v1641, %v1638
        %v1669 = vpack.c.b16 %v1642, %v1639
        %v1670 = vpack.c.b16 %v1643, %v1640
        %v1671 = vpack.c.b16 %v1647, %v1644
        %v1672 = vpack.c.b16 %v1648, %v1645
        %v1673 = vpack.c.b16 %v1649, %v1646
        %1698 = vmatprep.subr.bf16.mxu0 %v1651
        %1699 = vmatpush1.bf16.msra.mxu0 %v1650
        %1700 = vmatprep.subr.bf16.mxu0 %v1654
        %1701 = vmatpush1.bf16.msra.mxu0 %v1653
        %1702 = vmatprep.subr.bf16.mxu0 %v1657
        %1703 = vmatpush1.bf16.msra.mxu0 %v1656
        %1704 = vmatprep.subr.bf16.mxu0 %v1660
        %1705 = vmatpush1.bf16.msra.mxu0 %v1659
        %1706 = vmatprep.subr.bf16.mxu0 %v1663
        %1707 = vmatpush1.bf16.msra.mxu0 %v1662
        %1708 = vmatprep.subr.bf16.mxu0 %v1666
        %1709 = vmatpush1.bf16.msra.mxu0 %v1665
        %1710 = vmatprep.subr.bf16.mxu0 %v1669
        %1711 = vmatpush1.bf16.msra.mxu0 %v1668
        %1712 = vmatprep.subr.bf16.mxu0 %v1672
        %1713 = vmatpush1.bf16.msra.mxu0 %v1671
        %1714 = vmatprep.subr.bf16.mxu0 0
        %1715 = vmatpush1.bf16.msra.mxu0 0
        %1716 = vmatprep.subr.bf16.mxu0 0
        %1717 = vmatpush1.bf16.msra.mxu0 0
        %1718 = vmatprep.subr.bf16.mxu0 0
        %1719 = vmatpush1.bf16.msra.mxu0 0
        %1720 = vmatprep.subr.bf16.mxu0 0
        %1721 = vmatpush1.bf16.msra.mxu0 0
        %1722 = vmatprep.subr.bf16.mxu0 0
        %1723 = vmatpush1.bf16.msra.mxu0 0
        %1724 = vmatprep.subr.bf16.mxu0 0
        %1725 = vmatpush1.bf16.msra.mxu0 0
        %1726 = vmatprep.subr.bf16.mxu0 0
        %1727 = vmatpush1.bf16.msra.mxu0 0
        %1728 = vmatprep.subr.bf16.mxu0 0
        %1729 = vmatpush1.bf16.msra.mxu0 0
        %1730 = vmatprep.mubr.bf16.mxu0 0
        %1731 = vmatmul.mubr.bf16.gmra.mrb[0].mxu0 %v1530
        %v1732 = vpop.f32.mrb[0].mxu0
        %v1733 = vadd.f32 0.0, %v1732
        %v1734 = vpop.f32.mrb[0].mxu0
        %v1735 = vadd.f32 0.0, %v1734
        %v1736 = vpop.f32.mrb[0].mxu0
        %v1737 = vadd.f32 0.0, %v1736
        %v1738 = vpop.f32.mrb[0].mxu0
        %v1739 = vadd.f32 0.0, %v1738
        %1740 = vmatprep.mubr.bf16.mxu0 0
        %1741 = vmatmul.mubr.bf16.gmra.mrb[0].mxu0 %v1531
        %v1742 = vpop.f32.mrb[0].mxu0
        %v1743 = vadd.f32 0.0, %v1742
        %v1744 = vpop.f32.mrb[0].mxu0
        %v1745 = vadd.f32 0.0, %v1744
        %v1746 = vpop.f32.mrb[0].mxu0
        %v1747 = vadd.f32 0.0, %v1746
        %v1748 = vpop.f32.mrb[0].mxu0
        %v1749 = vadd.f32 0.0, %v1748
        %1750 = vmatprep.mubr.bf16.mxu0 0
        %1751 = vmatmul.mubr.bf16.gmra.mrb[0].mxu0 %v1532
        %v1752 = vpop.f32.mrb[0].mxu0
        %v1753 = vadd.f32 0.0, %v1752
        %v1754 = vpop.f32.mrb[0].mxu0
        %v1755 = vadd.f32 0.0, %v1754
        %v1756 = vpop.f32.mrb[0].mxu0
        %v1757 = vadd.f32 0.0, %v1756
        %v1758 = vpop.f32.mrb[0].mxu0
        %v1759 = vadd.f32 0.0, %v1758
        %1760 = vmatprep.mubr.bf16.mxu0 0
        %1761 = vmatmul.mubr.bf16.gmra.mrb[0].mxu0 %v1533
        %v1762 = vpop.f32.mrb[0].mxu0
        %v1763 = vadd.f32 0.0, %v1762
        %v1764 = vpop.f32.mrb[0].mxu0
        %v1765 = vadd.f32 0.0, %v1764
        %v1766 = vpop.f32.mrb[0].mxu0
        %v1767 = vadd.f32 0.0, %v1766
        %v1768 = vpop.f32.mrb[0].mxu0
        %v1769 = vadd.f32 0.0, %v1768
        %1770 = vmatprep.mubr.bf16.mxu0 0
        %1771 = vmatmul.mubr.bf16.gmra.mrb[0].mxu0 %v1534
        %v1772 = vpop.f32.mrb[0].mxu0
        %v1773 = vadd.f32 0.0, %v1772
        %v1774 = vpop.f32.mrb[0].mxu0
        %v1775 = vadd.f32 0.0, %v1774
        %v1776 = vpop.f32.mrb[0].mxu0
        %v1777 = vadd.f32 0.0, %v1776
        %v1778 = vpop.f32.mrb[0].mxu0
        %v1779 = vadd.f32 0.0, %v1778
        %1780 = vmatprep.mubr.bf16.mxu0 0
        %1781 = vmatmul.mubr.bf16.gmra.mrb[0].mxu0 %v1535
        %v1782 = vpop.f32.mrb[0].mxu0
        %v1783 = vadd.f32 0.0, %v1782
        %v1784 = vpop.f32.mrb[0].mxu0
        %v1785 = vadd.f32 0.0, %v1784
        %v1786 = vpop.f32.mrb[0].mxu0
        %v1787 = vadd.f32 0.0, %v1786
        %v1788 = vpop.f32.mrb[0].mxu0
        %v1789 = vadd.f32 0.0, %v1788
        %1790 = vmatprep.mubr.bf16.mxu0 0
        %1791 = vmatmul.mubr.bf16.gmra.mrb[0].mxu0 %v1536
        %v1792 = vpop.f32.mrb[0].mxu0
        %v1793 = vadd.f32 0.0, %v1792
        %v1794 = vpop.f32.mrb[0].mxu0
        %v1795 = vadd.f32 0.0, %v1794
        %v1796 = vpop.f32.mrb[0].mxu0
        %v1797 = vadd.f32 0.0, %v1796
        %v1798 = vpop.f32.mrb[0].mxu0
        %v1799 = vadd.f32 0.0, %v1798
        %1800 = vmatprep.mubr.bf16.mxu0 0
        %1801 = vmatmul.mubr.bf16.gmra.mrb[0].mxu0 %v1537
        %v1802 = vpop.f32.mrb[0].mxu0
        %v1803 = vadd.f32 0.0, %v1802
        %v1804 = vpop.f32.mrb[0].mxu0
        %v1805 = vadd.f32 0.0, %v1804
        %v1806 = vpop.f32.mrb[0].mxu0
        %v1807 = vadd.f32 0.0, %v1806
        %v1808 = vpop.f32.mrb[0].mxu0
        %v1809 = vadd.f32 0.0, %v1808
        %1810 = vdwg.mxu0
        %1811 = vmatprep.subr.bf16.mxu0 0
        %1812 = vmatpush1.bf16.msra.mxu0 %v1652
        %1813 = vmatprep.subr.bf16.mxu0 0
        %1814 = vmatpush1.bf16.msra.mxu0 %v1655
        %1815 = vmatprep.subr.bf16.mxu0 0
        %1816 = vmatpush1.bf16.msra.mxu0 %v1658
        %1817 = vmatprep.subr.bf16.mxu0 0
        %1818 = vmatpush1.bf16.msra.mxu0 %v1661
        %1819 = vmatprep.subr.bf16.mxu0 0
        %1820 = vmatpush1.bf16.msra.mxu0 %v1664
        %1821 = vmatprep.subr.bf16.mxu0 0
        %1822 = vmatpush1.bf16.msra.mxu0 %v1667
        %1823 = vmatprep.subr.bf16.mxu0 0
        %1824 = vmatpush1.bf16.msra.mxu0 %v1670
        %1825 = vmatprep.subr.bf16.mxu0 0
        %1826 = vmatpush1.bf16.msra.mxu0 %v1673
        %1827 = vmatprep.subr.bf16.mxu0 0
        %1828 = vmatpush1.bf16.msra.mxu0 0
        %1829 = vmatprep.subr.bf16.mxu0 0
        %1830 = vmatpush1.bf16.msra.mxu0 0
        %1831 = vmatprep.subr.bf16.mxu0 0
        %1832 = vmatpush1.bf16.msra.mxu0 0
        %1833 = vmatprep.subr.bf16.mxu0 0
        %1834 = vmatpush1.bf16.msra.mxu0 0
        %1835 = vmatprep.subr.bf16.mxu0 0
        %1836 = vmatpush1.bf16.msra.mxu0 0
        %1837 = vmatprep.subr.bf16.mxu0 0
        %1838 = vmatpush1.bf16.msra.mxu0 0
        %1839 = vmatprep.subr.bf16.mxu0 0
        %1840 = vmatpush1.bf16.msra.mxu0 0
        %1841 = vmatprep.subr.bf16.mxu0 0
        %1842 = vmatpush1.bf16.msra.mxu0 0
        %1843 = vmatprep.mubr.bf16.mxu0 0
        %1844 = vmatmul.mubr.bf16.gmra.mrb[0].mxu0 %v1530
        %v1845 = vpop.f32.mrb[0].mxu0
        %v1846 = vadd.f32 0.0, %v1845
        %v1847 = vpop.f32.mrb[0].mxu0
        %v1848 = vpop.f32.mrb[0].mxu0
        %v1849 = vadd.f32 0.0, %v1848
        %v1850 = vpop.f32.mrb[0].mxu0
        %1851 = vmatprep.mubr.bf16.mxu0 0
        %1852 = vmatmul.mubr.bf16.gmra.mrb[0].mxu0 %v1531
        %v1853 = vpop.f32.mrb[0].mxu0
        %v1854 = vadd.f32 0.0, %v1853
        %v1855 = vpop.f32.mrb[0].mxu0
        %v1856 = vpop.f32.mrb[0].mxu0
        %v1857 = vadd.f32 0.0, %v1856
        %v1858 = vpop.f32.mrb[0].mxu0
        %1859 = vmatprep.mubr.bf16.mxu0 0
        %1860 = vmatmul.mubr.bf16.gmra.mrb[0].mxu0 %v1532
        %v1861 = vpop.f32.mrb[0].mxu0
        %v1862 = vadd.f32 0.0, %v1861
        %v1863 = vpop.f32.mrb[0].mxu0
        %v1864 = vpop.f32.mrb[0].mxu0
        %v1865 = vadd.f32 0.0, %v1864
        %v1866 = vpop.f32.mrb[0].mxu0
        %1867 = vmatprep.mubr.bf16.mxu0 0
        %1868 = vmatmul.mubr.bf16.gmra.mrb[0].mxu0 %v1533
        %v1869 = vpop.f32.mrb[0].mxu0
        %v1870 = vadd.f32 0.0, %v1869
        %v1871 = vpop.f32.mrb[0].mxu0
        %v1872 = vpop.f32.mrb[0].mxu0
        %v1873 = vadd.f32 0.0, %v1872
        %v1874 = vpop.f32.mrb[0].mxu0
        %1875 = vmatprep.mubr.bf16.mxu0 0
        %1876 = vmatmul.mubr.bf16.gmra.mrb[0].mxu0 %v1534
        %v1877 = vpop.f32.mrb[0].mxu0
        %v1878 = vadd.f32 0.0, %v1877
        %v1879 = vpop.f32.mrb[0].mxu0
        %v1880 = vpop.f32.mrb[0].mxu0
        %v1881 = vadd.f32 0.0, %v1880
        %v1882 = vpop.f32.mrb[0].mxu0
        %1883 = vmatprep.mubr.bf16.mxu0 0
        %1884 = vmatmul.mubr.bf16.gmra.mrb[0].mxu0 %v1535
        %v1885 = vpop.f32.mrb[0].mxu0
        %v1886 = vadd.f32 0.0, %v1885
        %v1887 = vpop.f32.mrb[0].mxu0
        %v1888 = vpop.f32.mrb[0].mxu0
        %v1889 = vadd.f32 0.0, %v1888
        %v1890 = vpop.f32.mrb[0].mxu0
        %1891 = vmatprep.mubr.bf16.mxu0 0
        %1892 = vmatmul.mubr.bf16.gmra.mrb[0].mxu0 %v1536
        %v1893 = vpop.f32.mrb[0].mxu0
        %v1894 = vadd.f32 0.0, %v1893
        %v1895 = vpop.f32.mrb[0].mxu0
        %v1896 = vpop.f32.mrb[0].mxu0
        %v1897 = vadd.f32 0.0, %v1896
        %v1898 = vpop.f32.mrb[0].mxu0
        %1899 = vmatprep.mubr.bf16.mxu0 0
        %1900 = vmatmul.mubr.bf16.gmra.mrb[0].mxu0 %v1537
        %v1901 = vpop.f32.mrb[0].mxu0
        %v1902 = vadd.f32 0.0, %v1901
        %v1903 = vpop.f32.mrb[0].mxu0
        %v1904 = vpop.f32.mrb[0].mxu0
        %v1905 = vadd.f32 0.0, %v1904
        %v1906 = vpop.f32.mrb[0].mxu0
        %1907 = vdwg.mxu0
        %v1908 = vsel %vm1187, 0.0, %v1803
        %v1909 = vsel %vm1188, 0.0, %v1807
        %v1910 = vsel %vm1189, 0.0, %v1733
        %v1911 = vsel %vm1190, 0.0, %v1737
        %v1912 = vsel %vm1191, 0.0, %v1743
        %v1913 = vsel %vm1192, 0.0, %v1747
        %v1914 = vsel %vm1193, 0.0, %v1753
        %v1915 = vsel %vm1194, 0.0, %v1757
        %v1916 = vsel %vm1195, 0.0, %v1763
        %v1917 = vsel %vm1196, 0.0, %v1767
        %v1918 = vsel %vm1197, 0.0, %v1773
        %v1919 = vsel %vm1198, 0.0, %v1777
        %v1920 = vsel %vm1199, 0.0, %v1783
        %v1921 = vsel %vm1200, 0.0, %v1787
        %v1922 = vsel %vm1201, 0.0, %v1793
        %v1923 = vsel %vm1202, 0.0, %v1797
        %vm1924 = vcmp.ge.s32.totalorder %v1091, 112
        %vm1925 = vcmp.ge.s32.totalorder %v1092, 112
        %vm1926 = vcmp.ge.s32.totalorder %v1093, 112
        %vm1927 = vcmp.ge.s32.totalorder %v1094, 112
        %vm1928 = vcmp.ge.s32.totalorder %v1095, 112
        %vm1929 = vcmp.ge.s32.totalorder %v1096, 112
        %vm1930 = vcmp.ge.s32.totalorder %v1097, 112
        %vm1931 = vcmp.ge.s32.totalorder %v1098, 112
        %vm1932 = vcmp.ge.s32.totalorder %v1099, 112
        %vm1933 = vcmp.ge.s32.totalorder %v1100, 112
        %vm1934 = vcmp.ge.s32.totalorder %v1101, 112
        %vm1935 = vcmp.ge.s32.totalorder %v1102, 112
        %vm1936 = vcmp.ge.s32.totalorder %v1103, 112
        %vm1937 = vcmp.ge.s32.totalorder %v1104, 112
        %vm1938 = vcmp.ge.s32.totalorder %v1105, 112
        %vm1939 = vcmp.ge.s32.totalorder %v1106, 112
        %v1940 = vsel %vm1924, 1, 0
        %v1941 = vsel %vm1925, 1, 0
        %v1942 = vsel %vm1926, 1, 0
        %v1943 = vsel %vm1927, 1, 0
        %v1944 = vsel %vm1928, 1, 0
        %v1945 = vsel %vm1929, 1, 0
        %v1946 = vsel %vm1930, 1, 0
        %v1947 = vsel %vm1931, 1, 0
        %v1948 = vsel %vm1932, 1, 0
        %v1949 = vsel %vm1933, 1, 0
        %v1950 = vsel %vm1934, 1, 0
        %v1951 = vsel %vm1935, 1, 0
        %v1952 = vsel %vm1936, 1, 0
        %v1953 = vsel %vm1937, 1, 0
        %v1954 = vsel %vm1938, 1, 0
        %v1955 = vsel %vm1939, 1, 0
        %vm1956 = vcmp.eq.s32.totalorder %v1940, 1
        %vm1957 = vcmp.eq.s32.totalorder %v1941, 1
        %vm1958 = vcmp.eq.s32.totalorder %v1942, 1
        %vm1959 = vcmp.eq.s32.totalorder %v1943, 1
        %vm1960 = vcmp.eq.s32.totalorder %v1944, 1
        %vm1961 = vcmp.eq.s32.totalorder %v1945, 1
        %vm1962 = vcmp.eq.s32.totalorder %v1946, 1
        %vm1963 = vcmp.eq.s32.totalorder %v1947, 1
        %vm1964 = vcmp.eq.s32.totalorder %v1948, 1
        %vm1965 = vcmp.eq.s32.totalorder %v1949, 1
        %vm1966 = vcmp.eq.s32.totalorder %v1950, 1
        %vm1967 = vcmp.eq.s32.totalorder %v1951, 1
        %vm1968 = vcmp.eq.s32.totalorder %v1952, 1
        %vm1969 = vcmp.eq.s32.totalorder %v1953, 1
        %vm1970 = vcmp.eq.s32.totalorder %v1954, 1
        %vm1971 = vcmp.eq.s32.totalorder %v1955, 1
        %v1972 = vsel %vm1956, 0.0, %v1854
        %v1973 = vsel %vm1957, 0.0, %v1857
        %v1974 = vsel %vm1958, 0.0, %v1862
        %v1975 = vsel %vm1959, 0.0, %v1865
        %v1976 = vsel %vm1960, 0.0, %v1870
        %v1977 = vsel %vm1961, 0.0, %v1873
        %v1978 = vsel %vm1962, 0.0, %v1878
        %v1979 = vsel %vm1963, 0.0, %v1881
        %v1980 = vsel %vm1964, 0.0, %v1886
        %v1981 = vsel %vm1965, 0.0, %v1889
        %v1982 = vsel %vm1966, 0.0, %v1894
        %v1983 = vsel %vm1967, 0.0, %v1897
        %v1984 = vsel %vm1968, 0.0, %v1902
        %v1985 = vsel %vm1969, 0.0, %v1905
        %v1986 = vsel %vm1970, 0.0, %v1846
        %v1987 = vsel %vm1971, 0.0, %v1849
        %v1988 = vadd.f32 %v1735, %v1908
        %v1989 = vadd.f32 %v1739, %v1909
        %v1990 = vadd.f32 %v1745, %v1910
        %v1991 = vadd.f32 %v1749, %v1911
        %v1992 = vadd.f32 %v1755, %v1912
        %v1993 = vadd.f32 %v1759, %v1913
        %v1994 = vadd.f32 %v1765, %v1914
        %v1995 = vadd.f32 %v1769, %v1915
        %v1996 = vadd.f32 %v1775, %v1916
        %v1997 = vadd.f32 %v1779, %v1917
        %v1998 = vadd.f32 %v1785, %v1918
        %v1999 = vadd.f32 %v1789, %v1919
        %v2000 = vadd.f32 %v1795, %v1920
        %v2001 = vadd.f32 %v1799, %v1921
        %v2002 = vadd.f32 %v1805, %v1922
        %v2003 = vadd.f32 %v1809, %v1923
        %v2004 = vadd.f32 %v1988, %v1972
        %v2005 = vadd.f32 %v1989, %v1973
        %v2006 = vadd.f32 %v1990, %v1974
        %v2007 = vadd.f32 %v1991, %v1975
        %v2008 = vadd.f32 %v1992, %v1976
        %v2009 = vadd.f32 %v1993, %v1977
        %v2010 = vadd.f32 %v1994, %v1978
        %v2011 = vadd.f32 %v1995, %v1979
        %v2012 = vadd.f32 %v1996, %v1980
        %v2013 = vadd.f32 %v1997, %v1981
        %v2014 = vadd.f32 %v1998, %v1982
        %v2015 = vadd.f32 %v1999, %v1983
        %v2016 = vadd.f32 %v2000, %v1984
        %v2017 = vadd.f32 %v2001, %v1985
        %v2018 = vadd.f32 %v2002, %v1986
        %v2019 = vadd.f32 %v2003, %v1987
        %v2020 = vld [vmem:[%s4] sm:$0x1]
        %v2022 = vlaneseq
        %v2023 = vshrl.u32 %v2022, 7
        %v2024 = vsub.s32 0, %v2023
        %v2025 = vrot.slane %v2020, %v2024
        %v2027 = vadd.f32 %v2004, %v2025
        %v2028 = vadd.f32 %v2005, %v2025
        %v2029 = vadd.f32 %v2006, %v2025
        %v2030 = vadd.f32 %v2007, %v2025
        %v2031 = vadd.f32 %v2008, %v2025
        %v2032 = vadd.f32 %v2009, %v2025
        %v2033 = vadd.f32 %v2010, %v2025
        %v2034 = vadd.f32 %v2011, %v2025
        %v2035 = vadd.f32 %v2012, %v2025
        %v2036 = vadd.f32 %v2013, %v2025
        %v2037 = vadd.f32 %v2014, %v2025
        %v2038 = vadd.f32 %v2015, %v2025
        %v2039 = vadd.f32 %v2016, %v2025
        %v2040 = vadd.f32 %v2017, %v2025
        %v2041 = vadd.f32 %v2018, %v2025
        %v2042 = vadd.f32 %v2019, %v2025
        %v2043 = vmax.f32 %v2027, 0.0
        %v2044 = vmax.f32 %v2028, 0.0
        %v2045 = vmax.f32 %v2029, 0.0
        %v2046 = vmax.f32 %v2030, 0.0
        %v2047 = vmax.f32 %v2031, 0.0
        %v2048 = vmax.f32 %v2032, 0.0
        %v2049 = vmax.f32 %v2033, 0.0
        %v2050 = vmax.f32 %v2034, 0.0
        %v2051 = vmax.f32 %v2035, 0.0
        %v2052 = vmax.f32 %v2036, 0.0
        %v2053 = vmax.f32 %v2037, 0.0
        %v2054 = vmax.f32 %v2038, 0.0
        %v2055 = vmax.f32 %v2039, 0.0
        %v2056 = vmax.f32 %v2040, 0.0
        %v2057 = vmax.f32 %v2041, 0.0
        %v2058 = vmax.f32 %v2042, 0.0
        %v2059 = vmax.f32 %v2043, %v2045
        %v2060 = vmax.f32 %v2044, %v2046
        %v2061 = vmax.f32 %v2047, %v2049
        %v2062 = vmax.f32 %v2048, %v2050
        %v2063 = vmax.f32 %v2051, %v2053
        %v2064 = vmax.f32 %v2052, %v2054
        %v2065 = vmax.f32 %v2055, %v2057
        %v2066 = vmax.f32 %v2056, %v2058
        %v2067 = vpack.c.bf16 %v2060, %v2059
        %v2068 = vpack.c.bf16 %v2062, %v2061
        %v2069 = vpack.c.bf16 %v2064, %v2063
        %v2070 = vpack.c.bf16 %v2066, %v2065
        %v2071 = vld [vmem:[%s5] sm:$0xf]
        %v2072 = vld [vmem:[%s5 + $0x4] sm:$0xf]
        %v2073 = vld [vmem:[%s5 + $0x8] sm:$0xf]
        %v2074 = vld [vmem:[%s5 + $0xc] sm:$0xf]
        %v2075 = vld [vmem:[%s5 + $0x10] sm:$0xf]
        %v2076 = vld [vmem:[%s5 + $0x14] sm:$0xf]
        %v2077 = vld [vmem:[%s5 + $0x18] sm:$0xf]
        %v2078 = vld [vmem:[%s5 + $0x1c] sm:$0xf]
        %v2079 = vld [vmem:[%s5 + $0x20] sm:$0xf]
        %v2080 = vld [vmem:[%s5 + $0x24] sm:$0xf]
        %v2081 = vld [vmem:[%s5 + $0x28] sm:$0xf]
        %v2082 = vld [vmem:[%s5 + $0x2c] sm:$0xf]
        %v2083 = vld [vmem:[%s5 + $0x30] sm:$0xf]
        %v2084 = vld [vmem:[%s5 + $0x34] sm:$0xf]
        %v2085 = vld [vmem:[%s5 + $0x38] sm:$0xf]
        %v2086 = vld [vmem:[%s5 + $0x3c] sm:$0xf]
        %v2087 = vld [vmem:[%s5 + $0x40] sm:$0xf]
        %v2088 = vld [vmem:[%s5 + $0x44] sm:$0xf]
        %v2089 = vld [vmem:[%s5 + $0x48] sm:$0xf]
        %v2090 = vld [vmem:[%s5 + $0x4c] sm:$0xf]
        %v2091 = vld [vmem:[%s5 + $0x50] sm:$0xf]
        %v2092 = vld [vmem:[%s5 + $0x54] sm:$0xf]
        %v2093 = vld [vmem:[%s5 + $0x58] sm:$0xf]
        %v2094 = vld [vmem:[%s5 + $0x5c] sm:$0xf]
        %v2095 = vld [vmem:[%s5 + $0x60] sm:$0xf]
        %v2096 = vld [vmem:[%s5 + $0x64] sm:$0xf]
        %v2097 = vld [vmem:[%s5 + $0x68] sm:$0xf]
        %v2098 = vld [vmem:[%s5 + $0x6c] sm:$0xf]
        %v2099 = vld [vmem:[%s5 + $0x70] sm:$0xf]
        %v2100 = vld [vmem:[%s5 + $0x74] sm:$0xf]
        %v2101 = vld [vmem:[%s5 + $0x78] sm:$0xf]
        %v2102 = vld [vmem:[%s5 + $0x7c] sm:$0xf]
        %v2103 = vld [vmem:[%s5 + $0x80] sm:$0xf]
        %v2104 = vld [vmem:[%s5 + $0x84] sm:$0xf]
        %v2105 = vld [vmem:[%s5 + $0x88] sm:$0xf]
        %v2106 = vld [vmem:[%s5 + $0x8c] sm:$0xf]
        %v2107 = vld [vmem:[%s5 + $0x90] sm:$0xf]
        %v2108 = vld [vmem:[%s5 + $0x94] sm:$0xf]
        %v2109 = vld [vmem:[%s5 + $0x98] sm:$0xf]
        %v2110 = vld [vmem:[%s5 + $0x9c] sm:$0xf]
        %v2111 = vld [vmem:[%s5 + $0xa0] sm:$0xf]
        %v2112 = vld [vmem:[%s5 + $0xa4] sm:$0xf]
        %v2113 = vld [vmem:[%s5 + $0xa8] sm:$0xf]
        %v2114 = vld [vmem:[%s5 + $0xac] sm:$0xf]
        %v2115 = vld [vmem:[%s5 + $0xb0] sm:$0xf]
        %v2116 = vld [vmem:[%s5 + $0xb4] sm:$0xf]
        %v2117 = vld [vmem:[%s5 + $0xb8] sm:$0xf]
        %v2118 = vld [vmem:[%s5 + $0xbc] sm:$0xf]
        %v2119 = vld [vmem:[%s5 + $0xc0] sm:$0xf]
        %v2120 = vld [vmem:[%s5 + $0xc4] sm:$0xf]
        %v2121 = vld [vmem:[%s5 + $0xc8] sm:$0xf]
        %v2122 = vld [vmem:[%s5 + $0xcc] sm:$0xf]
        %v2123 = vld [vmem:[%s5 + $0xd0] sm:$0xf]
        %v2124 = vld [vmem:[%s5 + $0xd4] sm:$0xf]
        %v2125 = vld [vmem:[%s5 + $0xd8] sm:$0xf]
        %v2126 = vld [vmem:[%s5 + $0xdc] sm:$0xf]
        %v2127 = vld [vmem:[%s5 + $0xe0] sm:$0xf]
        %v2128 = vld [vmem:[%s5 + $0xe4] sm:$0xf]
        %v2129 = vld [vmem:[%s5 + $0xe8] sm:$0xf]
        %v2130 = vld [vmem:[%s5 + $0xec] sm:$0xf]
        %v2131 = vld [vmem:[%s5 + $0xf0] sm:$0xf]
        %v2132 = vld [vmem:[%s5 + $0xf4] sm:$0xf]
        %v2133 = vld [vmem:[%s5 + $0xf8] sm:$0xf]
        %v2134 = vld [vmem:[%s5 + $0xfc] sm:$0xf]
        %v2151 = vunpack.c.l.b16 %v2071
        %v2152 = vunpack.c.l.b16 %v2072
        %v2153 = vunpack.c.l.b16 %v2073
        %v2154 = vunpack.c.l.b16 %v2074
        %v2155 = vunpack.c.l.b16 %v2075
        %v2156 = vunpack.c.l.b16 %v2076
        %v2157 = vunpack.c.l.b16 %v2077
        %v2158 = vunpack.c.l.b16 %v2078
        %v2159 = vunpack.c.l.b16 %v2079
        %v2160 = vunpack.c.l.b16 %v2080
        %v2161 = vunpack.c.l.b16 %v2081
        %v2162 = vunpack.c.l.b16 %v2082
        %v2163 = vunpack.c.l.b16 %v2083
        %v2164 = vunpack.c.l.b16 %v2084
        %v2165 = vunpack.c.l.b16 %v2085
        %v2166 = vunpack.c.l.b16 %v2086
        %v2167 = vpack.c.b16 %v2152, %v2151
        %v2168 = vpack.c.b16 %v2154, %v2153
        %v2169 = vpack.c.b16 %v2156, %v2155
        %v2170 = vpack.c.b16 %v2158, %v2157
        %v2171 = vpack.c.b16 %v2160, %v2159
        %v2172 = vpack.c.b16 %v2162, %v2161
        %v2173 = vpack.c.b16 %v2164, %v2163
        %v2174 = vpack.c.b16 %v2166, %v2165
        %2183 = vmatprep.subr.bf16.mxu0 0
        %2184 = vmatpush1.bf16.msra.mxu0 %v2167
        %2185 = vmatprep.subr.bf16.mxu0 0
        %2186 = vmatpush1.bf16.msra.mxu0 %v2168
        %2187 = vmatprep.subr.bf16.mxu0 0
        %2188 = vmatpush1.bf16.msra.mxu0 %v2169
        %2189 = vmatprep.subr.bf16.mxu0 0
        %2190 = vmatpush1.bf16.msra.mxu0 %v2170
        %2191 = vmatprep.subr.bf16.mxu0 0
        %2192 = vmatpush1.bf16.msra.mxu0 %v2171
        %2193 = vmatprep.subr.bf16.mxu0 0
        %2194 = vmatpush1.bf16.msra.mxu0 %v2172
        %2195 = vmatprep.subr.bf16.mxu0 0
        %2196 = vmatpush1.bf16.msra.mxu0 %v2173
        %2197 = vmatprep.subr.bf16.mxu0 0
        %2198 = vmatpush1.bf16.msra.mxu0 %v2174
        %2199 = vmatprep.subr.bf16.mxu0 0
        %2200 = vmatpush1.bf16.msra.mxu0 0
        %2201 = vmatprep.subr.bf16.mxu0 0
        %2202 = vmatpush1.bf16.msra.mxu0 0
        %2203 = vmatprep.subr.bf16.mxu0 0
        %2204 = vmatpush1.bf16.msra.mxu0 0
        %2205 = vmatprep.subr.bf16.mxu0 0
        %2206 = vmatpush1.bf16.msra.mxu0 0
        %2207 = vmatprep.subr.bf16.mxu0 0
        %2208 = vmatpush1.bf16.msra.mxu0 0
        %2209 = vmatprep.subr.bf16.mxu0 0
        %2210 = vmatpush1.bf16.msra.mxu0 0
        %2211 = vmatprep.subr.bf16.mxu0 0
        %2212 = vmatpush1.bf16.msra.mxu0 0
        %2213 = vmatprep.subr.bf16.mxu0 0
        %2214 = vmatpush1.bf16.msra.mxu0 0
        %2215 = vmatprep.mubr.bf16.mxu0 0
        %2216 = vmatmul.mubr.bf16.gmra.mrb[0].mxu0 %v2067
        %v2217 = vpop.f32.mrb[0].mxu0
        %v2218 = vadd.f32 0.0, %v2217
        %v2219 = vpop.f32.mrb[0].mxu0
        %v2220 = vpop.f32.mrb[0].mxu0
        %v2221 = vadd.f32 0.0, %v2220
        %v2222 = vpop.f32.mrb[0].mxu0
        %2223 = vdwg.mxu0
        %v2240 = vunpack.c.l.b16 %v2087
        %v2241 = vunpack.c.l.b16 %v2088
        %v2242 = vunpack.c.l.b16 %v2089
        %v2243 = vunpack.c.l.b16 %v2090
        %v2244 = vunpack.c.l.b16 %v2091
        %v2245 = vunpack.c.l.b16 %v2092
        %v2246 = vunpack.c.l.b16 %v2093
        %v2247 = vunpack.c.l.b16 %v2094
        %v2248 = vunpack.c.l.b16 %v2095
        %v2249 = vunpack.c.l.b16 %v2096
        %v2250 = vunpack.c.l.b16 %v2097
        %v2251 = vunpack.c.l.b16 %v2098
        %v2252 = vunpack.c.l.b16 %v2099
        %v2253 = vunpack.c.l.b16 %v2100
        %v2254 = vunpack.c.l.b16 %v2101
        %v2255 = vunpack.c.l.b16 %v2102
        %v2256 = vpack.c.b16 %v2241, %v2240
        %v2257 = vpack.c.b16 %v2243, %v2242
        %v2258 = vpack.c.b16 %v2245, %v2244
        %v2259 = vpack.c.b16 %v2247, %v2246
        %v2260 = vpack.c.b16 %v2249, %v2248
        %v2261 = vpack.c.b16 %v2251, %v2250
        %v2262 = vpack.c.b16 %v2253, %v2252
        %v2263 = vpack.c.b16 %v2255, %v2254
        %2272 = vmatprep.subr.bf16.mxu0 0
        %2273 = vmatpush1.bf16.msra.mxu0 %v2256
        %2274 = vmatprep.subr.bf16.mxu0 0
        %2275 = vmatpush1.bf16.msra.mxu0 %v2257
        %2276 = vmatprep.subr.bf16.mxu0 0
        %2277 = vmatpush1.bf16.msra.mxu0 %v2258
        %2278 = vmatprep.subr.bf16.mxu0 0
        %2279 = vmatpush1.bf16.msra.mxu0 %v2259
        %2280 = vmatprep.subr.bf16.mxu0 0
        %2281 = vmatpush1.bf16.msra.mxu0 %v2260
        %2282 = vmatprep.subr.bf16.mxu0 0
        %2283 = vmatpush1.bf16.msra.mxu0 %v2261
        %2284 = vmatprep.subr.bf16.mxu0 0
        %2285 = vmatpush1.bf16.msra.mxu0 %v2262
        %2286 = vmatprep.subr.bf16.mxu0 0
        %2287 = vmatpush1.bf16.msra.mxu0 %v2263
        %2288 = vmatprep.subr.bf16.mxu0 0
        %2289 = vmatpush1.bf16.msra.mxu0 0
        %2290 = vmatprep.subr.bf16.mxu0 0
        %2291 = vmatpush1.bf16.msra.mxu0 0
        %2292 = vmatprep.subr.bf16.mxu0 0
        %2293 = vmatpush1.bf16.msra.mxu0 0
        %2294 = vmatprep.subr.bf16.mxu0 0
        %2295 = vmatpush1.bf16.msra.mxu0 0
        %2296 = vmatprep.subr.bf16.mxu0 0
        %2297 = vmatpush1.bf16.msra.mxu0 0
        %2298 = vmatprep.subr.bf16.mxu0 0
        %2299 = vmatpush1.bf16.msra.mxu0 0
        %2300 = vmatprep.subr.bf16.mxu0 0
        %2301 = vmatpush1.bf16.msra.mxu0 0
        %2302 = vmatprep.subr.bf16.mxu0 0
        %2303 = vmatpush1.bf16.msra.mxu0 0
        %2304 = vmatprep.mubr.bf16.mxu0 0
        %2305 = vmatmul.mubr.bf16.gmra.mrb[0].mxu0 %v2068
        %v2306 = vpop.f32.mrb[0].mxu0
        %v2307 = vadd.f32 0.0, %v2306
        %v2308 = vpop.f32.mrb[0].mxu0
        %v2309 = vpop.f32.mrb[0].mxu0
        %v2310 = vadd.f32 0.0, %v2309
        %v2311 = vpop.f32.mrb[0].mxu0
        %2312 = vdwg.mxu0
        %v2329 = vunpack.c.l.b16 %v2103
        %v2330 = vunpack.c.l.b16 %v2104
        %v2331 = vunpack.c.l.b16 %v2105
        %v2332 = vunpack.c.l.b16 %v2106
        %v2333 = vunpack.c.l.b16 %v2107
        %v2334 = vunpack.c.l.b16 %v2108
        %v2335 = vunpack.c.l.b16 %v2109
        %v2336 = vunpack.c.l.b16 %v2110
        %v2337 = vunpack.c.l.b16 %v2111
        %v2338 = vunpack.c.l.b16 %v2112
        %v2339 = vunpack.c.l.b16 %v2113
        %v2340 = vunpack.c.l.b16 %v2114
        %v2341 = vunpack.c.l.b16 %v2115
        %v2342 = vunpack.c.l.b16 %v2116
        %v2343 = vunpack.c.l.b16 %v2117
        %v2344 = vunpack.c.l.b16 %v2118
        %v2345 = vpack.c.b16 %v2330, %v2329
        %v2346 = vpack.c.b16 %v2332, %v2331
        %v2347 = vpack.c.b16 %v2334, %v2333
        %v2348 = vpack.c.b16 %v2336, %v2335
        %v2349 = vpack.c.b16 %v2338, %v2337
        %v2350 = vpack.c.b16 %v2340, %v2339
        %v2351 = vpack.c.b16 %v2342, %v2341
        %v2352 = vpack.c.b16 %v2344, %v2343
        %2361 = vmatprep.subr.bf16.mxu0 0
        %2362 = vmatpush1.bf16.msra.mxu0 %v2345
        %2363 = vmatprep.subr.bf16.mxu0 0
        %2364 = vmatpush1.bf16.msra.mxu0 %v2346
        %2365 = vmatprep.subr.bf16.mxu0 0
        %2366 = vmatpush1.bf16.msra.mxu0 %v2347
        %2367 = vmatprep.subr.bf16.mxu0 0
        %2368 = vmatpush1.bf16.msra.mxu0 %v2348
        %2369 = vmatprep.subr.bf16.mxu0 0
        %2370 = vmatpush1.bf16.msra.mxu0 %v2349
        %2371 = vmatprep.subr.bf16.mxu0 0
        %2372 = vmatpush1.bf16.msra.mxu0 %v2350
        %2373 = vmatprep.subr.bf16.mxu0 0
        %2374 = vmatpush1.bf16.msra.mxu0 %v2351
        %2375 = vmatprep.subr.bf16.mxu0 0
        %2376 = vmatpush1.bf16.msra.mxu0 %v2352
        %2377 = vmatprep.subr.bf16.mxu0 0
        %2378 = vmatpush1.bf16.msra.mxu0 0
        %2379 = vmatprep.subr.bf16.mxu0 0
        %2380 = vmatpush1.bf16.msra.mxu0 0
        %2381 = vmatprep.subr.bf16.mxu0 0
        %2382 = vmatpush1.bf16.msra.mxu0 0
        %2383 = vmatprep.subr.bf16.mxu0 0
        %2384 = vmatpush1.bf16.msra.mxu0 0
        %2385 = vmatprep.subr.bf16.mxu0 0
        %2386 = vmatpush1.bf16.msra.mxu0 0
        %2387 = vmatprep.subr.bf16.mxu0 0
        %2388 = vmatpush1.bf16.msra.mxu0 0
        %2389 = vmatprep.subr.bf16.mxu0 0
        %2390 = vmatpush1.bf16.msra.mxu0 0
        %2391 = vmatprep.subr.bf16.mxu0 0
        %2392 = vmatpush1.bf16.msra.mxu0 0
        %2393 = vmatprep.mubr.bf16.mxu0 0
        %2394 = vmatmul.mubr.bf16.gmra.mrb[0].mxu0 %v2069
        %v2395 = vpop.f32.mrb[0].mxu0
        %v2396 = vadd.f32 0.0, %v2395
        %v2397 = vpop.f32.mrb[0].mxu0
        %v2398 = vpop.f32.mrb[0].mxu0
        %v2399 = vadd.f32 0.0, %v2398
        %v2400 = vpop.f32.mrb[0].mxu0
        %2401 = vdwg.mxu0
        %v2418 = vunpack.c.l.b16 %v2119
        %v2419 = vunpack.c.l.b16 %v2120
        %v2420 = vunpack.c.l.b16 %v2121
        %v2421 = vunpack.c.l.b16 %v2122
        %v2422 = vunpack.c.l.b16 %v2123
        %v2423 = vunpack.c.l.b16 %v2124
        %v2424 = vunpack.c.l.b16 %v2125
        %v2425 = vunpack.c.l.b16 %v2126
        %v2426 = vunpack.c.l.b16 %v2127
        %v2427 = vunpack.c.l.b16 %v2128
        %v2428 = vunpack.c.l.b16 %v2129
        %v2429 = vunpack.c.l.b16 %v2130
        %v2430 = vunpack.c.l.b16 %v2131
        %v2431 = vunpack.c.l.b16 %v2132
        %v2432 = vunpack.c.l.b16 %v2133
        %v2433 = vunpack.c.l.b16 %v2134
        %v2434 = vpack.c.b16 %v2419, %v2418
        %v2435 = vpack.c.b16 %v2421, %v2420
        %v2436 = vpack.c.b16 %v2423, %v2422
        %v2437 = vpack.c.b16 %v2425, %v2424
        %v2438 = vpack.c.b16 %v2427, %v2426
        %v2439 = vpack.c.b16 %v2429, %v2428
        %v2440 = vpack.c.b16 %v2431, %v2430
        %v2441 = vpack.c.b16 %v2433, %v2432
        %2450 = vmatprep.subr.bf16.mxu0 0
        %2451 = vmatpush1.bf16.msra.mxu0 %v2434
        %2452 = vmatprep.subr.bf16.mxu0 0
        %2453 = vmatpush1.bf16.msra.mxu0 %v2435
        %2454 = vmatprep.subr.bf16.mxu0 0
        %2455 = vmatpush1.bf16.msra.mxu0 %v2436
        %2456 = vmatprep.subr.bf16.mxu0 0
        %2457 = vmatpush1.bf16.msra.mxu0 %v2437
        %2458 = vmatprep.subr.bf16.mxu0 0
        %2459 = vmatpush1.bf16.msra.mxu0 %v2438
        %2460 = vmatprep.subr.bf16.mxu0 0
        %2461 = vmatpush1.bf16.msra.mxu0 %v2439
        %2462 = vmatprep.subr.bf16.mxu0 0
        %2463 = vmatpush1.bf16.msra.mxu0 %v2440
        %2464 = vmatprep.subr.bf16.mxu0 0
        %2465 = vmatpush1.bf16.msra.mxu0 %v2441
        %2466 = vmatprep.subr.bf16.mxu0 0
        %2467 = vmatpush1.bf16.msra.mxu0 0
        %2468 = vmatprep.subr.bf16.mxu0 0
        %2469 = vmatpush1.bf16.msra.mxu0 0
        %2470 = vmatprep.subr.bf16.mxu0 0
        %2471 = vmatpush1.bf16.msra.mxu0 0
        %2472 = vmatprep.subr.bf16.mxu0 0
        %2473 = vmatpush1.bf16.msra.mxu0 0
        %2474 = vmatprep.subr.bf16.mxu0 0
        %2475 = vmatpush1.bf16.msra.mxu0 0
        %2476 = vmatprep.subr.bf16.mxu0 0
        %2477 = vmatpush1.bf16.msra.mxu0 0
        %2478 = vmatprep.subr.bf16.mxu0 0
        %2479 = vmatpush1.bf16.msra.mxu0 0
        %2480 = vmatprep.subr.bf16.mxu0 0
        %2481 = vmatpush1.bf16.msra.mxu0 0
        %2482 = vmatprep.mubr.bf16.mxu0 0
        %2483 = vmatmul.mubr.bf16.gmra.mrb[0].mxu0 %v2070
        %v2484 = vpop.f32.mrb[0].mxu0
        %v2485 = vadd.f32 0.0, %v2484
        %v2486 = vpop.f32.mrb[0].mxu0
        %v2487 = vpop.f32.mrb[0].mxu0
        %v2488 = vadd.f32 0.0, %v2487
        %v2489 = vpop.f32.mrb[0].mxu0
        %2490 = vdwg.mxu0
        %v2491 = vadd.f32 %v2218, %v2307
        %v2492 = vadd.f32 %v2491, %v2396
        %v2493 = vadd.f32 %v2492, %v2485
        %v2494 = vadd.f32 %v2221, %v2310
        %v2495 = vadd.f32 %v2494, %v2399
        %v2496 = vadd.f32 %v2495, %v2488
        %v2497 = vld [vmem:[%s6] sm:$0x1]
        %v2499 = vlaneseq
        %v2500 = vshrl.u32 %v2499, 7
        %v2501 = vsub.s32 0, %v2500
        %v2502 = vrot.slane %v2497, %v2501
        %v2504 = vadd.f32 %v2493, %v2502
        %v2505 = vadd.f32 %v2496, %v2502
        %2506 = vst [vmem:[%s445] sm:$0xff] %v2504
        %2507 = vst [vmem:[%s445 + $0x8] sm:$0xff] %v2505
        %s2508 = smul.u32 2, %s18
        %p2509 = scmp.lt.s32.totalorder %s2508, 3
        %s2510 = scalar_select %p2509, %s2508, 3
        %s2511 = smul.addr %s2510, 8
        %s2512 = scalar_lea.vmem %s7, %s2511
        // Predicated region
        $region90: #{bert_cnn_classifier_forward.1} parent=84 // pred_check
          %p2513 = pneg %p188
        $region91: #{bert_cnn_classifier_forward.1} parent=84 // pred_check_branch
          %2515 = sbr.rel (%p2513) target = $region93
        $region92: #{bert_cnn_classifier_forward.1} parent=84 // pred_region
          %s2516 = smul.u32 2, %s18
        $region93: #{bert_cnn_classifier_forward.1} parent=84 // pred_fallthru
          _
      $region85: #{bert_cnn_classifier_forward.1} parent=5 // pred_fallthru
        _
      %p2517 = scmp.le.s32.totalorder 2, %s13
      // Predicated region
      $region94: #{bert_cnn_classifier_forward.1} parent=5 // pred_check
        %p2518 = pneg %p2517
      $region95: #{bert_cnn_classifier_forward.1} parent=5 // pred_check_branch
        %2520 = sbr.rel (%p2518) target = $region97
      $region96: #{bert_cnn_classifier_forward.1} parent=5 // pred_region
        %s2521 = ssub.s32 %s13, 2
        // Predicated region
        $region98: #{bert_cnn_classifier_forward.1} parent=96 // pred_check
          %p2522 = pneg %p194
        $region99: #{bert_cnn_classifier_forward.1} parent=96 // pred_check_branch
          %2524 = sbr.rel (%p2522) target = $region101
        $region100: #{bert_cnn_classifier_forward.1} parent=96 // pred_region
          %s2525 = smul.u32 2, %s19
          %p2526 = scmp.lt.s32.totalorder %s2525, 3
          %s2527 = scalar_select %p2526, %s2525, 3
          %s2528 = smul.addr %s2527, 8
          %s2529 = scalar_lea.vmem %s7, %s2528
        $region101: #{bert_cnn_classifier_forward.1} parent=96 // pred_fallthru
          _
      $region97: #{bert_cnn_classifier_forward.1} parent=5 // pred_fallthru
        _
    $region6: #{bert_cnn_classifier_forward.1} parent=1 // loop_footer
      %s17 = sadd.s32 1, %s13
    $region7: #{bert_cnn_classifier_forward.1} parent=1 // loop_footer_branch
      %12 = sbr.rel target = $region3
    $region8: #{bert_cnn_classifier_forward.1} parent=1 // loop_exit
      _

</llo_original>
